<compile_context>
chip_gen: v6e
topology: v6e:2x2x1
jax: 0.10.0
libtpu: 0.0.40
codegen_flags: <defaults>
</compile_context>

<pallas_src>
import jax
import jax.numpy as jnp
from jax.experimental import pallas as pl
from jax.experimental.pallas import tpu as pltpu


def lama_export_kernel(img_ref, mask_ref, w_ref, b_ref, out_ref):
    # img_ref : (1, 3, H, W)      resident full-frame image (VMEM, planar NCHW)
    # mask_ref: (1, 1, H, W)      resident full-frame mask  (VMEM)
    # w_ref   : (108,)            SMEM flat conv weights, idx ((kh*3+kw)*4+ci)*3+co
    # b_ref   : (3,)              SMEM bias
    # out_ref : (1, 3, S, W)      output row strip (S rows of H)
    H = img_ref.shape[2]
    W = img_ref.shape[3]
    S = out_ref.shape[2]

    s = pl.program_id(1)
    n_s = pl.num_programs(1)
    r0 = pl.multiple_of(s * S, 8)          # first image row of this strip

    # ---- Hoist every scalar read out of the FMA-dense region. ----
    wts = [w_ref[i] for i in range(108)]
    bvals = [b_ref[i] for i in range(3)]

    # ---- Strip-local planes: lane-dense (S, W), fully aligned. ----
    m = mask_ref[0, 0, pl.ds(r0, S), :]                     # (S, W)
    inv = 1.0 - m
    img = [img_ref[0, c, pl.ds(r0, S), :] for c in range(3)]
    masked = [img[c] * inv for c in range(3)]               # reused in epilogue
    planes = masked + [m]                                   # conv input, ci = 0..3

    # ---- One-row vertical halo taken from the resident full-frame inputs. ----
    up_ok = jnp.where(s > 0, 1.0, 0.0)            # 0 at the image top edge
    dn_ok = jnp.where(s < n_s - 1, 1.0, 0.0)      # 0 at the image bottom edge
    r_up = jnp.maximum(r0 - 1, 0)
    r_dn = jnp.minimum(r0 + S, H - 1)
    m_up = mask_ref[0, 0, pl.ds(r_up, 1), :]                # (1, W)
    m_dn = mask_ref[0, 0, pl.ds(r_dn, 1), :]
    halo_up = [img_ref[0, c, pl.ds(r_up, 1), :] * (1.0 - m_up) for c in range(3)] + [m_up]
    halo_dn = [img_ref[0, c, pl.ds(r_dn, 1), :] * (1.0 - m_dn) for c in range(3)] + [m_dn]

    row = jax.lax.broadcasted_iota(jnp.int32, (S, W), 0)
    col = jax.lax.broadcasted_iota(jnp.int32, (S, W), 1)

    # Shifted-tap builders: XLU rolls + edge masks, no misaligned slices.
    def shift_up(p, halo):        # tap[i] = p[i-1]; row 0 <- row r0-1 (0 at top)
        return jnp.where(row == 0, halo * up_ok, pltpu.roll(p, 1, 0))

    def shift_dn(p, halo):        # tap[i] = p[i+1]; row S-1 <- row r0+S (0 at bottom)
        return jnp.where(row == S - 1, halo * dn_ok, pltpu.roll(p, S - 1, 0))

    def shift_left(p):            # tap[:, j] = p[:, j-1]; col 0 <- 0
        return jnp.where(col == 0, 0.0, pltpu.roll(p, 1, 1))

    def shift_right(p):           # tap[:, j] = p[:, j+1]; col W-1 <- 0
        return jnp.where(col == W - 1, 0.0, pltpu.roll(p, W - 1, 1))

    # Synthetic generator: 3x3 conv (4 -> 3 channels) fully unrolled as VPU
    # FMAs over (S, W) strip planes with scalar weights, then sigmoid.
    # TODO(synk): real LaMa FFC-ResNet generator is external to the module;
    # replaced by this deterministic 3x3 conv + sigmoid stand-in.
    acc = [jnp.zeros((S, W), jnp.float32) for _ in range(3)]
    for ci in range(4):
        vtaps = (shift_up(planes[ci], halo_up[ci]),   # kh = 0  (dh = -1)
                 planes[ci],                          # kh = 1  (dh =  0)
                 shift_dn(planes[ci], halo_dn[ci]))   # kh = 2  (dh = +1)
        for kh in range(3):
            v = vtaps[kh]
            htaps = (shift_left(v), v, shift_right(v))  # kw = 0, 1, 2
            for kw in range(3):
                tap = htaps[kw]
                base = ((kh * 3 + kw) * 4 + ci) * 3
                for co in range(3):
                    acc[co] = acc[co] + tap * wts[base + co]

    # Post-processing: sigmoid, composite (reusing masked planes), *255 clamp.
    for co in range(3):
        pred = jax.nn.sigmoid(acc[co] + bvals[co])
        out_ref[0, co] = jnp.clip((m * pred + masked[co]) * 255.0, 0.0, 255.0)


def _pick_strip(H):
    """Largest multiple of 8 that divides H and is <= 64 (bounds the live
    working set of the unrolled conv chain); fall back to the full height."""
    best = None
    for cand in range(8, min(H, 64) + 1, 8):
        if H % cand == 0:
            best = cand
    return best if best is not None else H


def export_lama_forward(image_nchw, mask_nchw, w, bias, *, strip=None):
    """image_nchw: (B,3,H,W) f32 in [0,1]; mask_nchw: (B,1,H,W) f32 {0,1}.
    w: (3,3,4,3) conv weights (kh, kw, cin=[img x3, mask x1], cout=3); bias: (3,)."""
    B, C, H, W = image_nchw.shape
    assert C == 3
    if strip is None:
        strip = _pick_strip(H)
    assert H % strip == 0 and (strip % 8 == 0 or strip == H), (H, strip)
    n_strips = H // strip

    image = image_nchw.astype(jnp.float32)
    mask = mask_nchw.astype(jnp.float32)
    w_flat = w.astype(jnp.float32).reshape(-1)          # (108,)
    bias_flat = bias.astype(jnp.float32).reshape(-1)    # (3,)

    return pl.pallas_call(
        lama_export_kernel,
        out_shape=jax.ShapeDtypeStruct((B, 3, H, W), jnp.float32),
        grid=(B, n_strips),
        in_specs=[
            # Whole-frame resident inputs (index map constant in the strip axis
            # -> fetched once per batch element, provides the vertical halo).
            pl.BlockSpec((1, 3, H, W), lambda b, s: (b, 0, 0, 0)),
            pl.BlockSpec((1, 1, H, W), lambda b, s: (b, 0, 0, 0)),
            pl.BlockSpec(memory_space=pltpu.MemorySpace.SMEM),   # weights
            pl.BlockSpec(memory_space=pltpu.MemorySpace.SMEM),   # bias
        ],
        out_specs=pl.BlockSpec((1, 3, strip, W), lambda b, s: (b, 0, s, 0)),
        compiler_params=pltpu.CompilerParams(
            # Batch AND row strips shard across TensorCores (v7x megacore).
            dimension_semantics=("parallel", "parallel"),
            vmem_limit_bytes=64 * 1024 * 1024,
        ),
    )(image, mask, w_flat, bias_flat)


def reference_forward(image, mask, w, bias):
    """Pure-JAX reference of the same synthetic ExportLama forward (NCHW)."""
    masked = image * (1.0 - mask)
    x = jnp.concatenate([masked, mask], axis=1)                  # (B,4,H,W)
    w_oihw = jnp.transpose(w, (3, 2, 0, 1))                      # (cout,cin,kh,kw)
    pred = jax.lax.conv_general_dilated(
        x, w_oihw, window_strides=(1, 1), padding="SAME",
        dimension_numbers=("NCHW", "OIHW", "NCHW"))
    pred = jax.nn.sigmoid(pred + bias.reshape(1, 3, 1, 1))
    inpainted = mask * pred + (1.0 - mask) * image
    return jnp.clip(inpainted * 255.0, 0.0, 255.0)


if __name__ == "__main__":
    key = jax.random.PRNGKey(0)
    k_img, k_msk, k_w, k_b = jax.random.split(key, 4)

    # Small but lane-dense shapes (W = 128 lanes); strip=8 -> 2 row strips per
    # image, exercising the top-edge, cross-strip, and bottom-edge halo paths.
    B, H, W = 2, 16, 128
    image = jax.random.uniform(k_img, (B, 3, H, W), jnp.float32)          # [0,1]
    mask = (jax.random.uniform(k_msk, (B, 1, H, W)) > 0.5).astype(jnp.float32)

    # Deterministic synthetic generator weights (3x3 conv, 4 -> 3 channels).
    w = 0.1 * jax.random.normal(k_w, (3, 3, 4, 3), jnp.float32)
    bias = 0.1 * jax.random.normal(k_b, (3,), jnp.float32)

    out = export_lama_forward(image, mask, w, bias, strip=8)
    jax.block_until_ready(out)

    ref = reference_forward(image, mask, w, bias)
    assert out.shape == (B, 3, H, W)
    err = float(jnp.max(jnp.abs(out - ref)))
    assert err < 1e-3, f"Pallas kernel mismatch vs reference: {err}"

    print("KERNEL_OK")
</pallas_src>

<mosaic_0001>
module attributes {stable_mosaic.version = 11 : i64} {
  func.func @lama_export_kernel(%arg0: i32, %arg1: i32, %arg2: memref<1x3x16x128xf32, #tpu.memory_space<vmem>>, %arg3: memref<1x1x16x128xf32, #tpu.memory_space<vmem>>, %arg4: memref<108xf32, #tpu.memory_space<smem>>, %arg5: memref<3xf32, #tpu.memory_space<smem>>, %arg6: memref<1x3x8x128xf32, #tpu.memory_space<vmem>>) attributes {dimension_semantics = [#tpu.dimension_semantics<parallel>, #tpu.dimension_semantics<parallel>], iteration_bounds = array<i64: 2, 2>, scalar_prefetch = 0 : i64, scratch_operands = 0 : i64, tpu.core_type = #tpu.core_type<tc>, window_params = [{transform_indices = @transform_0, window_bounds = array<i64: 1, 3, 16, 128>}, {transform_indices = @transform_1, window_bounds = array<i64: 1, 1, 16, 128>}, {transform_indices = @transform_2, window_bounds = array<i64: 108>}, {transform_indices = @transform_3, window_bounds = array<i64: 3>}, {transform_indices = @transform_4, window_bounds = array<i64: 1, 3, 8, 128>}]} {
    %c8_i32 = arith.constant 8 : i32
    %0 = arith.muli %arg1, %c8_i32 : i32
    %1 = tpu.assume_multiple %0, 8 : i32
    %c0 = arith.constant 0 : index
    %2 = memref.load %arg4[%c0] : memref<108xf32, #tpu.memory_space<smem>>
    %c1 = arith.constant 1 : index
    %3 = memref.load %arg4[%c1] : memref<108xf32, #tpu.memory_space<smem>>
    %c2 = arith.constant 2 : index
    %4 = memref.load %arg4[%c2] : memref<108xf32, #tpu.memory_space<smem>>
    %c3 = arith.constant 3 : index
    %5 = memref.load %arg4[%c3] : memref<108xf32, #tpu.memory_space<smem>>
    %c4 = arith.constant 4 : index
    %6 = memref.load %arg4[%c4] : memref<108xf32, #tpu.memory_space<smem>>
    %c5 = arith.constant 5 : index
    %7 = memref.load %arg4[%c5] : memref<108xf32, #tpu.memory_space<smem>>
    %c6 = arith.constant 6 : index
    %8 = memref.load %arg4[%c6] : memref<108xf32, #tpu.memory_space<smem>>
    %c7 = arith.constant 7 : index
    %9 = memref.load %arg4[%c7] : memref<108xf32, #tpu.memory_space<smem>>
    %c8 = arith.constant 8 : index
    %10 = memref.load %arg4[%c8] : memref<108xf32, #tpu.memory_space<smem>>
    %c9 = arith.constant 9 : index
    %11 = memref.load %arg4[%c9] : memref<108xf32, #tpu.memory_space<smem>>
    %c10 = arith.constant 10 : index
    %12 = memref.load %arg4[%c10] : memref<108xf32, #tpu.memory_space<smem>>
    %c11 = arith.constant 11 : index
    %13 = memref.load %arg4[%c11] : memref<108xf32, #tpu.memory_space<smem>>
    %c12 = arith.constant 12 : index
    %14 = memref.load %arg4[%c12] : memref<108xf32, #tpu.memory_space<smem>>
    %c13 = arith.constant 13 : index
    %15 = memref.load %arg4[%c13] : memref<108xf32, #tpu.memory_space<smem>>
    %c14 = arith.constant 14 : index
    %16 = memref.load %arg4[%c14] : memref<108xf32, #tpu.memory_space<smem>>
    %c15 = arith.constant 15 : index
    %17 = memref.load %arg4[%c15] : memref<108xf32, #tpu.memory_space<smem>>
    %c16 = arith.constant 16 : index
    %18 = memref.load %arg4[%c16] : memref<108xf32, #tpu.memory_space<smem>>
    %c17 = arith.constant 17 : index
    %19 = memref.load %arg4[%c17] : memref<108xf32, #tpu.memory_space<smem>>
    %c18 = arith.constant 18 : index
    %20 = memref.load %arg4[%c18] : memref<108xf32, #tpu.memory_space<smem>>
    %c19 = arith.constant 19 : index
    %21 = memref.load %arg4[%c19] : memref<108xf32, #tpu.memory_space<smem>>
    %c20 = arith.constant 20 : index
    %22 = memref.load %arg4[%c20] : memref<108xf32, #tpu.memory_space<smem>>
    %c21 = arith.constant 21 : index
    %23 = memref.load %arg4[%c21] : memref<108xf32, #tpu.memory_space<smem>>
    %c22 = arith.constant 22 : index
    %24 = memref.load %arg4[%c22] : memref<108xf32, #tpu.memory_space<smem>>
    %c23 = arith.constant 23 : index
    %25 = memref.load %arg4[%c23] : memref<108xf32, #tpu.memory_space<smem>>
    %c24 = arith.constant 24 : index
    %26 = memref.load %arg4[%c24] : memref<108xf32, #tpu.memory_space<smem>>
    %c25 = arith.constant 25 : index
    %27 = memref.load %arg4[%c25] : memref<108xf32, #tpu.memory_space<smem>>
    %c26 = arith.constant 26 : index
    %28 = memref.load %arg4[%c26] : memref<108xf32, #tpu.memory_space<smem>>
    %c27 = arith.constant 27 : index
    %29 = memref.load %arg4[%c27] : memref<108xf32, #tpu.memory_space<smem>>
    %c28 = arith.constant 28 : index
    %30 = memref.load %arg4[%c28] : memref<108xf32, #tpu.memory_space<smem>>
    %c29 = arith.constant 29 : index
    %31 = memref.load %arg4[%c29] : memref<108xf32, #tpu.memory_space<smem>>
    %c30 = arith.constant 30 : index
    %32 = memref.load %arg4[%c30] : memref<108xf32, #tpu.memory_space<smem>>
    %c31 = arith.constant 31 : index
    %33 = memref.load %arg4[%c31] : memref<108xf32, #tpu.memory_space<smem>>
    %c32 = arith.constant 32 : index
    %34 = memref.load %arg4[%c32] : memref<108xf32, #tpu.memory_space<smem>>
    %c33 = arith.constant 33 : index
    %35 = memref.load %arg4[%c33] : memref<108xf32, #tpu.memory_space<smem>>
    %c34 = arith.constant 34 : index
    %36 = memref.load %arg4[%c34] : memref<108xf32, #tpu.memory_space<smem>>
    %c35 = arith.constant 35 : index
    %37 = memref.load %arg4[%c35] : memref<108xf32, #tpu.memory_space<smem>>
    %c36 = arith.constant 36 : index
    %38 = memref.load %arg4[%c36] : memref<108xf32, #tpu.memory_space<smem>>
    %c37 = arith.constant 37 : index
    %39 = memref.load %arg4[%c37] : memref<108xf32, #tpu.memory_space<smem>>
    %c38 = arith.constant 38 : index
    %40 = memref.load %arg4[%c38] : memref<108xf32, #tpu.memory_space<smem>>
    %c39 = arith.constant 39 : index
    %41 = memref.load %arg4[%c39] : memref<108xf32, #tpu.memory_space<smem>>
    %c40 = arith.constant 40 : index
    %42 = memref.load %arg4[%c40] : memref<108xf32, #tpu.memory_space<smem>>
    %c41 = arith.constant 41 : index
    %43 = memref.load %arg4[%c41] : memref<108xf32, #tpu.memory_space<smem>>
    %c42 = arith.constant 42 : index
    %44 = memref.load %arg4[%c42] : memref<108xf32, #tpu.memory_space<smem>>
    %c43 = arith.constant 43 : index
    %45 = memref.load %arg4[%c43] : memref<108xf32, #tpu.memory_space<smem>>
    %c44 = arith.constant 44 : index
    %46 = memref.load %arg4[%c44] : memref<108xf32, #tpu.memory_space<smem>>
    %c45 = arith.constant 45 : index
    %47 = memref.load %arg4[%c45] : memref<108xf32, #tpu.memory_space<smem>>
    %c46 = arith.constant 46 : index
    %48 = memref.load %arg4[%c46] : memref<108xf32, #tpu.memory_space<smem>>
    %c47 = arith.constant 47 : index
    %49 = memref.load %arg4[%c47] : memref<108xf32, #tpu.memory_space<smem>>
    %c48 = arith.constant 48 : index
    %50 = memref.load %arg4[%c48] : memref<108xf32, #tpu.memory_space<smem>>
    %c49 = arith.constant 49 : index
    %51 = memref.load %arg4[%c49] : memref<108xf32, #tpu.memory_space<smem>>
    %c50 = arith.constant 50 : index
    %52 = memref.load %arg4[%c50] : memref<108xf32, #tpu.memory_space<smem>>
    %c51 = arith.constant 51 : index
    %53 = memref.load %arg4[%c51] : memref<108xf32, #tpu.memory_space<smem>>
    %c52 = arith.constant 52 : index
    %54 = memref.load %arg4[%c52] : memref<108xf32, #tpu.memory_space<smem>>
    %c53 = arith.constant 53 : index
    %55 = memref.load %arg4[%c53] : memref<108xf32, #tpu.memory_space<smem>>
    %c54 = arith.constant 54 : index
    %56 = memref.load %arg4[%c54] : memref<108xf32, #tpu.memory_space<smem>>
    %c55 = arith.constant 55 : index
    %57 = memref.load %arg4[%c55] : memref<108xf32, #tpu.memory_space<smem>>
    %c56 = arith.constant 56 : index
    %58 = memref.load %arg4[%c56] : memref<108xf32, #tpu.memory_space<smem>>
    %c57 = arith.constant 57 : index
    %59 = memref.load %arg4[%c57] : memref<108xf32, #tpu.memory_space<smem>>
    %c58 = arith.constant 58 : index
    %60 = memref.load %arg4[%c58] : memref<108xf32, #tpu.memory_space<smem>>
    %c59 = arith.constant 59 : index
    %61 = memref.load %arg4[%c59] : memref<108xf32, #tpu.memory_space<smem>>
    %c60 = arith.constant 60 : index
    %62 = memref.load %arg4[%c60] : memref<108xf32, #tpu.memory_space<smem>>
    %c61 = arith.constant 61 : index
    %63 = memref.load %arg4[%c61] : memref<108xf32, #tpu.memory_space<smem>>
    %c62 = arith.constant 62 : index
    %64 = memref.load %arg4[%c62] : memref<108xf32, #tpu.memory_space<smem>>
    %c63 = arith.constant 63 : index
    %65 = memref.load %arg4[%c63] : memref<108xf32, #tpu.memory_space<smem>>
    %c64 = arith.constant 64 : index
    %66 = memref.load %arg4[%c64] : memref<108xf32, #tpu.memory_space<smem>>
    %c65 = arith.constant 65 : index
    %67 = memref.load %arg4[%c65] : memref<108xf32, #tpu.memory_space<smem>>
    %c66 = arith.constant 66 : index
    %68 = memref.load %arg4[%c66] : memref<108xf32, #tpu.memory_space<smem>>
    %c67 = arith.constant 67 : index
    %69 = memref.load %arg4[%c67] : memref<108xf32, #tpu.memory_space<smem>>
    %c68 = arith.constant 68 : index
    %70 = memref.load %arg4[%c68] : memref<108xf32, #tpu.memory_space<smem>>
    %c69 = arith.constant 69 : index
    %71 = memref.load %arg4[%c69] : memref<108xf32, #tpu.memory_space<smem>>
    %c70 = arith.constant 70 : index
    %72 = memref.load %arg4[%c70] : memref<108xf32, #tpu.memory_space<smem>>
    %c71 = arith.constant 71 : index
    %73 = memref.load %arg4[%c71] : memref<108xf32, #tpu.memory_space<smem>>
    %c72 = arith.constant 72 : index
    %74 = memref.load %arg4[%c72] : memref<108xf32, #tpu.memory_space<smem>>
    %c73 = arith.constant 73 : index
    %75 = memref.load %arg4[%c73] : memref<108xf32, #tpu.memory_space<smem>>
    %c74 = arith.constant 74 : index
    %76 = memref.load %arg4[%c74] : memref<108xf32, #tpu.memory_space<smem>>
    %c75 = arith.constant 75 : index
    %77 = memref.load %arg4[%c75] : memref<108xf32, #tpu.memory_space<smem>>
    %c76 = arith.constant 76 : index
    %78 = memref.load %arg4[%c76] : memref<108xf32, #tpu.memory_space<smem>>
    %c77 = arith.constant 77 : index
    %79 = memref.load %arg4[%c77] : memref<108xf32, #tpu.memory_space<smem>>
    %c78 = arith.constant 78 : index
    %80 = memref.load %arg4[%c78] : memref<108xf32, #tpu.memory_space<smem>>
    %c79 = arith.constant 79 : index
    %81 = memref.load %arg4[%c79] : memref<108xf32, #tpu.memory_space<smem>>
    %c80 = arith.constant 80 : index
    %82 = memref.load %arg4[%c80] : memref<108xf32, #tpu.memory_space<smem>>
    %c81 = arith.constant 81 : index
    %83 = memref.load %arg4[%c81] : memref<108xf32, #tpu.memory_space<smem>>
    %c82 = arith.constant 82 : index
    %84 = memref.load %arg4[%c82] : memref<108xf32, #tpu.memory_space<smem>>
    %c83 = arith.constant 83 : index
    %85 = memref.load %arg4[%c83] : memref<108xf32, #tpu.memory_space<smem>>
    %c84 = arith.constant 84 : index
    %86 = memref.load %arg4[%c84] : memref<108xf32, #tpu.memory_space<smem>>
    %c85 = arith.constant 85 : index
    %87 = memref.load %arg4[%c85] : memref<108xf32, #tpu.memory_space<smem>>
    %c86 = arith.constant 86 : index
    %88 = memref.load %arg4[%c86] : memref<108xf32, #tpu.memory_space<smem>>
    %c87 = arith.constant 87 : index
    %89 = memref.load %arg4[%c87] : memref<108xf32, #tpu.memory_space<smem>>
    %c88 = arith.constant 88 : index
    %90 = memref.load %arg4[%c88] : memref<108xf32, #tpu.memory_space<smem>>
    %c89 = arith.constant 89 : index
    %91 = memref.load %arg4[%c89] : memref<108xf32, #tpu.memory_space<smem>>
    %c90 = arith.constant 90 : index
    %92 = memref.load %arg4[%c90] : memref<108xf32, #tpu.memory_space<smem>>
    %c91 = arith.constant 91 : index
    %93 = memref.load %arg4[%c91] : memref<108xf32, #tpu.memory_space<smem>>
    %c92 = arith.constant 92 : index
    %94 = memref.load %arg4[%c92] : memref<108xf32, #tpu.memory_space<smem>>
    %c93 = arith.constant 93 : index
    %95 = memref.load %arg4[%c93] : memref<108xf32, #tpu.memory_space<smem>>
    %c94 = arith.constant 94 : index
    %96 = memref.load %arg4[%c94] : memref<108xf32, #tpu.memory_space<smem>>
    %c95 = arith.constant 95 : index
    %97 = memref.load %arg4[%c95] : memref<108xf32, #tpu.memory_space<smem>>
    %c96 = arith.constant 96 : index
    %98 = memref.load %arg4[%c96] : memref<108xf32, #tpu.memory_space<smem>>
    %c97 = arith.constant 97 : index
    %99 = memref.load %arg4[%c97] : memref<108xf32, #tpu.memory_space<smem>>
    %c98 = arith.constant 98 : index
    %100 = memref.load %arg4[%c98] : memref<108xf32, #tpu.memory_space<smem>>
    %c99 = arith.constant 99 : index
    %101 = memref.load %arg4[%c99] : memref<108xf32, #tpu.memory_space<smem>>
    %c100 = arith.constant 100 : index
    %102 = memref.load %arg4[%c100] : memref<108xf32, #tpu.memory_space<smem>>
    %c101 = arith.constant 101 : index
    %103 = memref.load %arg4[%c101] : memref<108xf32, #tpu.memory_space<smem>>
    %c102 = arith.constant 102 : index
    %104 = memref.load %arg4[%c102] : memref<108xf32, #tpu.memory_space<smem>>
    %c103 = arith.constant 103 : index
    %105 = memref.load %arg4[%c103] : memref<108xf32, #tpu.memory_space<smem>>
    %c104 = arith.constant 104 : index
    %106 = memref.load %arg4[%c104] : memref<108xf32, #tpu.memory_space<smem>>
    %c105 = arith.constant 105 : index
    %107 = memref.load %arg4[%c105] : memref<108xf32, #tpu.memory_space<smem>>
    %c106 = arith.constant 106 : index
    %108 = memref.load %arg4[%c106] : memref<108xf32, #tpu.memory_space<smem>>
    %c107 = arith.constant 107 : index
    %109 = memref.load %arg4[%c107] : memref<108xf32, #tpu.memory_space<smem>>
    %c0_0 = arith.constant 0 : index
    %110 = memref.load %arg5[%c0_0] : memref<3xf32, #tpu.memory_space<smem>>
    %c1_1 = arith.constant 1 : index
    %111 = memref.load %arg5[%c1_1] : memref<3xf32, #tpu.memory_space<smem>>
    %c2_2 = arith.constant 2 : index
    %112 = memref.load %arg5[%c2_2] : memref<3xf32, #tpu.memory_space<smem>>
    %c0_3 = arith.constant 0 : index
    %c0_4 = arith.constant 0 : index
    %113 = arith.index_cast %1 : i32 to index
    %c0_5 = arith.constant 0 : index
    %114 = vector.load %arg3[%c0_3, %c0_4, %113, %c0_5] : memref<1x1x16x128xf32, #tpu.memory_space<vmem>>, vector<1x1x8x128xf32>
    %115 = vector.shape_cast %114 : vector<1x1x8x128xf32> to vector<8x128xf32>
    %cst = arith.constant 1.000000e+00 : f32
    %116 = vector.broadcast %cst : f32 to vector<8x128xf32>
    %117 = arith.subf %116, %115 : vector<8x128xf32>
    %c0_6 = arith.constant 0 : index
    %c0_7 = arith.constant 0 : index
    %118 = arith.index_cast %1 : i32 to index
    %c0_8 = arith.constant 0 : index
    %119 = vector.load %arg2[%c0_6, %c0_7, %118, %c0_8] : memref<1x3x16x128xf32, #tpu.memory_space<vmem>>, vector<1x1x8x128xf32>
    %120 = vector.shape_cast %119 : vector<1x1x8x128xf32> to vector<8x128xf32>
    %c0_9 = arith.constant 0 : index
    %c1_10 = arith.constant 1 : index
    %121 = arith.index_cast %1 : i32 to index
    %c0_11 = arith.constant 0 : index
    %122 = vector.load %arg2[%c0_9, %c1_10, %121, %c0_11] : memref<1x3x16x128xf32, #tpu.memory_space<vmem>>, vector<1x1x8x128xf32>
    %123 = vector.shape_cast %122 : vector<1x1x8x128xf32> to vector<8x128xf32>
    %c0_12 = arith.constant 0 : index
    %c2_13 = arith.constant 2 : index
    %124 = arith.index_cast %1 : i32 to index
    %c0_14 = arith.constant 0 : index
    %125 = vector.load %arg2[%c0_12, %c2_13, %124, %c0_14] : memref<1x3x16x128xf32, #tpu.memory_space<vmem>>, vector<1x1x8x128xf32>
    %126 = vector.shape_cast %125 : vector<1x1x8x128xf32> to vector<8x128xf32>
    %127 = arith.mulf %120, %117 : vector<8x128xf32>
    %128 = arith.mulf %123, %117 : vector<8x128xf32>
    %129 = arith.mulf %126, %117 : vector<8x128xf32>
    %c0_i32 = arith.constant 0 : i32
    %130 = arith.cmpi sgt, %arg1, %c0_i32 : i32
    %cst_15 = arith.constant 1.000000e+00 : f32
    %cst_16 = arith.constant 0.000000e+00 : f32
    %131 = arith.select %130, %cst_15, %cst_16 : f32
    %c1_i32 = arith.constant 1 : i32
    %132 = arith.cmpi slt, %arg1, %c1_i32 : i32
    %cst_17 = arith.constant 1.000000e+00 : f32
    %cst_18 = arith.constant 0.000000e+00 : f32
    %133 = arith.select %132, %cst_17, %cst_18 : f32
    %c1_i32_19 = arith.constant 1 : i32
    %134 = arith.subi %1, %c1_i32_19 : i32
    %c0_i32_20 = arith.constant 0 : i32
    %135 = arith.maxsi %134, %c0_i32_20 : i32
    %c8_i32_21 = arith.constant 8 : i32
    %136 = arith.addi %1, %c8_i32_21 : i32
    %c15_i32 = arith.constant 15 : i32
    %137 = arith.minsi %136, %c15_i32 : i32
    %c0_22 = arith.constant 0 : index
    %c0_23 = arith.constant 0 : index
    %138 = arith.index_cast %135 : i32 to index
    %c0_24 = arith.constant 0 : index
    %139 = vector.load %arg3[%c0_22, %c0_23, %138, %c0_24] : memref<1x1x16x128xf32, #tpu.memory_space<vmem>>, vector<1x1x1x128xf32>
    %140 = vector.shape_cast %139 : vector<1x1x1x128xf32> to vector<1x128xf32>
    %c0_25 = arith.constant 0 : index
    %c0_26 = arith.constant 0 : index
    %141 = arith.index_cast %137 : i32 to index
    %c0_27 = arith.constant 0 : index
    %142 = vector.load %arg3[%c0_25, %c0_26, %141, %c0_27] : memref<1x1x16x128xf32, #tpu.memory_space<vmem>>, vector<1x1x1x128xf32>
    %143 = vector.shape_cast %142 : vector<1x1x1x128xf32> to vector<1x128xf32>
    %c0_28 = arith.constant 0 : index
    %c0_29 = arith.constant 0 : index
    %144 = arith.index_cast %135 : i32 to index
    %c0_30 = arith.constant 0 : index
    %145 = vector.load %arg2[%c0_28, %c0_29, %144, %c0_30] : memref<1x3x16x128xf32, #tpu.memory_space<vmem>>, vector<1x1x1x128xf32>
    %146 = vector.shape_cast %145 : vector<1x1x1x128xf32> to vector<1x128xf32>
    %cst_31 = arith.constant 1.000000e+00 : f32
    %147 = vector.broadcast %cst_31 : f32 to vector<1x128xf32>
    %148 = arith.subf %147, %140 : vector<1x128xf32>
    %149 = arith.mulf %146, %148 : vector<1x128xf32>
    %c0_32 = arith.constant 0 : index
    %c1_33 = arith.constant 1 : index
    %150 = arith.index_cast %135 : i32 to index
    %c0_34 = arith.constant 0 : index
    %151 = vector.load %arg2[%c0_32, %c1_33, %150, %c0_34] : memref<1x3x16x128xf32, #tpu.memory_space<vmem>>, vector<1x1x1x128xf32>
    %152 = vector.shape_cast %151 : vector<1x1x1x128xf32> to vector<1x128xf32>
    %cst_35 = arith.constant 1.000000e+00 : f32
    %153 = vector.broadcast %cst_35 : f32 to vector<1x128xf32>
    %154 = arith.subf %153, %140 : vector<1x128xf32>
    %155 = arith.mulf %152, %154 : vector<1x128xf32>
    %c0_36 = arith.constant 0 : index
    %c2_37 = arith.constant 2 : index
    %156 = arith.index_cast %135 : i32 to index
    %c0_38 = arith.constant 0 : index
    %157 = vector.load %arg2[%c0_36, %c2_37, %156, %c0_38] : memref<1x3x16x128xf32, #tpu.memory_space<vmem>>, vector<1x1x1x128xf32>
    %158 = vector.shape_cast %157 : vector<1x1x1x128xf32> to vector<1x128xf32>
    %cst_39 = arith.constant 1.000000e+00 : f32
    %159 = vector.broadcast %cst_39 : f32 to vector<1x128xf32>
    %160 = arith.subf %159, %140 : vector<1x128xf32>
    %161 = arith.mulf %158, %160 : vector<1x128xf32>
    %c0_40 = arith.constant 0 : index
    %c0_41 = arith.constant 0 : index
    %162 = arith.index_cast %137 : i32 to index
    %c0_42 = arith.constant 0 : index
    %163 = vector.load %arg2[%c0_40, %c0_41, %162, %c0_42] : memref<1x3x16x128xf32, #tpu.memory_space<vmem>>, vector<1x1x1x128xf32>
    %164 = vector.shape_cast %163 : vector<1x1x1x128xf32> to vector<1x128xf32>
    %cst_43 = arith.constant 1.000000e+00 : f32
    %165 = vector.broadcast %cst_43 : f32 to vector<1x128xf32>
    %166 = arith.subf %165, %143 : vector<1x128xf32>
    %167 = arith.mulf %164, %166 : vector<1x128xf32>
    %c0_44 = arith.constant 0 : index
    %c1_45 = arith.constant 1 : index
    %168 = arith.index_cast %137 : i32 to index
    %c0_46 = arith.constant 0 : index
    %169 = vector.load %arg2[%c0_44, %c1_45, %168, %c0_46] : memref<1x3x16x128xf32, #tpu.memory_space<vmem>>, vector<1x1x1x128xf32>
    %170 = vector.shape_cast %169 : vector<1x1x1x128xf32> to vector<1x128xf32>
    %cst_47 = arith.constant 1.000000e+00 : f32
    %171 = vector.broadcast %cst_47 : f32 to vector<1x128xf32>
    %172 = arith.subf %171, %143 : vector<1x128xf32>
    %173 = arith.mulf %170, %172 : vector<1x128xf32>
    %c0_48 = arith.constant 0 : index
    %c2_49 = arith.constant 2 : index
    %174 = arith.index_cast %137 : i32 to index
    %c0_50 = arith.constant 0 : index
    %175 = vector.load %arg2[%c0_48, %c2_49, %174, %c0_50] : memref<1x3x16x128xf32, #tpu.memory_space<vmem>>, vector<1x1x1x128xf32>
    %176 = vector.shape_cast %175 : vector<1x1x1x128xf32> to vector<1x128xf32>
    %cst_51 = arith.constant 1.000000e+00 : f32
    %177 = vector.broadcast %cst_51 : f32 to vector<1x128xf32>
    %178 = arith.subf %177, %143 : vector<1x128xf32>
    %179 = arith.mulf %176, %178 : vector<1x128xf32>
    %180 = tpu.iota {dimensions = array<i32: 0>} : vector<8x128xi32>
    %181 = tpu.iota {dimensions = array<i32: 1>} : vector<8x128xi32>
    %cst_52 = arith.constant 0.000000e+00 : f32
    %182 = vector.broadcast %cst_52 : f32 to vector<8x128xf32>
    %cst_53 = arith.constant 0.000000e+00 : f32
    %183 = vector.broadcast %cst_53 : f32 to vector<8x128xf32>
    %cst_54 = arith.constant 0.000000e+00 : f32
    %184 = vector.broadcast %cst_54 : f32 to vector<8x128xf32>
    %c0_i32_55 = arith.constant 0 : i32
    %185 = vector.broadcast %c0_i32_55 : i32 to vector<8x128xi32>
    %186 = arith.cmpi eq, %180, %185 : vector<8x128xi32>
    %187 = vector.broadcast %131 : f32 to vector<1x128xf32>
    %188 = arith.mulf %149, %187 : vector<1x128xf32>
    %c1_i32_56 = arith.constant 1 : i32
    %189 = tpu.dynamic_rotate %127 by %c1_i32_56 dim 0 : vector<8x128xf32>, i32 -> vector<8x128xf32>
    %190 = vector.shape_cast %188 : vector<1x128xf32> to vector<1x128xf32>
    %191 = vector.broadcast %190 : vector<1x128xf32> to vector<8x128xf32>
    %192 = arith.select %186, %191, %189 : vector<8x128xi1>, vector<8x128xf32>
    %c7_i32 = arith.constant 7 : i32
    %193 = vector.broadcast %c7_i32 : i32 to vector<8x128xi32>
    %194 = arith.cmpi eq, %180, %193 : vector<8x128xi32>
    %195 = vector.broadcast %133 : f32 to vector<1x128xf32>
    %196 = arith.mulf %167, %195 : vector<1x128xf32>
    %c7_i32_57 = arith.constant 7 : i32
    %197 = tpu.dynamic_rotate %127 by %c7_i32_57 dim 0 : vector<8x128xf32>, i32 -> vector<8x128xf32>
    %198 = vector.shape_cast %196 : vector<1x128xf32> to vector<1x128xf32>
    %199 = vector.broadcast %198 : vector<1x128xf32> to vector<8x128xf32>
    %200 = arith.select %194, %199, %197 : vector<8x128xi1>, vector<8x128xf32>
    %c0_i32_58 = arith.constant 0 : i32
    %201 = vector.broadcast %c0_i32_58 : i32 to vector<8x128xi32>
    %202 = arith.cmpi eq, %181, %201 : vector<8x128xi32>
    %c1_i32_59 = arith.constant 1 : i32
    %203 = tpu.dynamic_rotate %192 by %c1_i32_59 dim 1 : vector<8x128xf32>, i32 -> vector<8x128xf32>
    %cst_60 = arith.constant 0.000000e+00 : f32
    %204 = vector.broadcast %cst_60 : f32 to vector<8x128xf32>
    %205 = arith.select %202, %204, %203 : vector<8x128xi1>, vector<8x128xf32>
    %c127_i32 = arith.constant 127 : i32
    %206 = vector.broadcast %c127_i32 : i32 to vector<8x128xi32>
    %207 = arith.cmpi eq, %181, %206 : vector<8x128xi32>
    %c127_i32_61 = arith.constant 127 : i32
    %208 = tpu.dynamic_rotate %192 by %c127_i32_61 dim 1 : vector<8x128xf32>, i32 -> vector<8x128xf32>
    %cst_62 = arith.constant 0.000000e+00 : f32
    %209 = vector.broadcast %cst_62 : f32 to vector<8x128xf32>
    %210 = arith.select %207, %209, %208 : vector<8x128xi1>, vector<8x128xf32>
    %211 = vector.broadcast %2 : f32 to vector<8x128xf32>
    %212 = arith.mulf %205, %211 : vector<8x128xf32>
    %213 = arith.addf %182, %212 : vector<8x128xf32>
    %214 = vector.broadcast %3 : f32 to vector<8x128xf32>
    %215 = arith.mulf %205, %214 : vector<8x128xf32>
    %216 = arith.addf %183, %215 : vector<8x128xf32>
    %217 = vector.broadcast %4 : f32 to vector<8x128xf32>
    %218 = arith.mulf %205, %217 : vector<8x128xf32>
    %219 = arith.addf %184, %218 : vector<8x128xf32>
    %220 = vector.broadcast %14 : f32 to vector<8x128xf32>
    %221 = arith.mulf %192, %220 : vector<8x128xf32>
    %222 = arith.addf %213, %221 : vector<8x128xf32>
    %223 = vector.broadcast %15 : f32 to vector<8x128xf32>
    %224 = arith.mulf %192, %223 : vector<8x128xf32>
    %225 = arith.addf %216, %224 : vector<8x128xf32>
    %226 = vector.broadcast %16 : f32 to vector<8x128xf32>
    %227 = arith.mulf %192, %226 : vector<8x128xf32>
    %228 = arith.addf %219, %227 : vector<8x128xf32>
    %229 = vector.broadcast %26 : f32 to vector<8x128xf32>
    %230 = arith.mulf %210, %229 : vector<8x128xf32>
    %231 = arith.addf %222, %230 : vector<8x128xf32>
    %232 = vector.broadcast %27 : f32 to vector<8x128xf32>
    %233 = arith.mulf %210, %232 : vector<8x128xf32>
    %234 = arith.addf %225, %233 : vector<8x128xf32>
    %235 = vector.broadcast %28 : f32 to vector<8x128xf32>
    %236 = arith.mulf %210, %235 : vector<8x128xf32>
    %237 = arith.addf %228, %236 : vector<8x128xf32>
    %c0_i32_63 = arith.constant 0 : i32
    %238 = vector.broadcast %c0_i32_63 : i32 to vector<8x128xi32>
    %239 = arith.cmpi eq, %181, %238 : vector<8x128xi32>
    %c1_i32_64 = arith.constant 1 : i32
    %240 = tpu.dynamic_rotate %127 by %c1_i32_64 dim 1 : vector<8x128xf32>, i32 -> vector<8x128xf32>
    %cst_65 = arith.constant 0.000000e+00 : f32
    %241 = vector.broadcast %cst_65 : f32 to vector<8x128xf32>
    %242 = arith.select %239, %241, %240 : vector<8x128xi1>, vector<8x128xf32>
    %c127_i32_66 = arith.constant 127 : i32
    %243 = vector.broadcast %c127_i32_66 : i32 to vector<8x128xi32>
    %244 = arith.cmpi eq, %181, %243 : vector<8x128xi32>
    %c127_i32_67 = arith.constant 127 : i32
    %245 = tpu.dynamic_rotate %127 by %c127_i32_67 dim 1 : vector<8x128xf32>, i32 -> vector<8x128xf32>
    %cst_68 = arith.constant 0.000000e+00 : f32
    %246 = vector.broadcast %cst_68 : f32 to vector<8x128xf32>
    %247 = arith.select %244, %246, %245 : vector<8x128xi1>, vector<8x128xf32>
    %248 = vector.broadcast %38 : f32 to vector<8x128xf32>
    %249 = arith.mulf %242, %248 : vector<8x128xf32>
    %250 = arith.addf %231, %249 : vector<8x128xf32>
    %251 = vector.broadcast %39 : f32 to vector<8x128xf32>
    %252 = arith.mulf %242, %251 : vector<8x128xf32>
    %253 = arith.addf %234, %252 : vector<8x128xf32>
    %254 = vector.broadcast %40 : f32 to vector<8x128xf32>
    %255 = arith.mulf %242, %254 : vector<8x128xf32>
    %256 = arith.addf %237, %255 : vector<8x128xf32>
    %257 = vector.broadcast %50 : f32 to vector<8x128xf32>
    %258 = arith.mulf %127, %257 : vector<8x128xf32>
    %259 = arith.addf %250, %258 : vector<8x128xf32>
    %260 = vector.broadcast %51 : f32 to vector<8x128xf32>
    %261 = arith.mulf %127, %260 : vector<8x128xf32>
    %262 = arith.addf %253, %261 : vector<8x128xf32>
    %263 = vector.broadcast %52 : f32 to vector<8x128xf32>
    %264 = arith.mulf %127, %263 : vector<8x128xf32>
    %265 = arith.addf %256, %264 : vector<8x128xf32>
    %266 = vector.broadcast %62 : f32 to vector<8x128xf32>
    %267 = arith.mulf %247, %266 : vector<8x128xf32>
    %268 = arith.addf %259, %267 : vector<8x128xf32>
    %269 = vector.broadcast %63 : f32 to vector<8x128xf32>
    %270 = arith.mulf %247, %269 : vector<8x128xf32>
    %271 = arith.addf %262, %270 : vector<8x128xf32>
    %272 = vector.broadcast %64 : f32 to vector<8x128xf32>
    %273 = arith.mulf %247, %272 : vector<8x128xf32>
    %274 = arith.addf %265, %273 : vector<8x128xf32>
    %c0_i32_69 = arith.constant 0 : i32
    %275 = vector.broadcast %c0_i32_69 : i32 to vector<8x128xi32>
    %276 = arith.cmpi eq, %181, %275 : vector<8x128xi32>
    %c1_i32_70 = arith.constant 1 : i32
    %277 = tpu.dynamic_rotate %200 by %c1_i32_70 dim 1 : vector<8x128xf32>, i32 -> vector<8x128xf32>
    %cst_71 = arith.constant 0.000000e+00 : f32
    %278 = vector.broadcast %cst_71 : f32 to vector<8x128xf32>
    %279 = arith.select %276, %278, %277 : vector<8x128xi1>, vector<8x128xf32>
    %c127_i32_72 = arith.constant 127 : i32
    %280 = vector.broadcast %c127_i32_72 : i32 to vector<8x128xi32>
    %281 = arith.cmpi eq, %181, %280 : vector<8x128xi32>
    %c127_i32_73 = arith.constant 127 : i32
    %282 = tpu.dynamic_rotate %200 by %c127_i32_73 dim 1 : vector<8x128xf32>, i32 -> vector<8x128xf32>
    %cst_74 = arith.constant 0.000000e+00 : f32
    %283 = vector.broadcast %cst_74 : f32 to vector<8x128xf32>
    %284 = arith.select %281, %283, %282 : vector<8x128xi1>, vector<8x128xf32>
    %285 = vector.broadcast %74 : f32 to vector<8x128xf32>
    %286 = arith.mulf %279, %285 : vector<8x128xf32>
    %287 = arith.addf %268, %286 : vector<8x128xf32>
    %288 = vector.broadcast %75 : f32 to vector<8x128xf32>
    %289 = arith.mulf %279, %288 : vector<8x128xf32>
    %290 = arith.addf %271, %289 : vector<8x128xf32>
    %291 = vector.broadcast %76 : f32 to vector<8x128xf32>
    %292 = arith.mulf %279, %291 : vector<8x128xf32>
    %293 = arith.addf %274, %292 : vector<8x128xf32>
    %294 = vector.broadcast %86 : f32 to vector<8x128xf32>
    %295 = arith.mulf %200, %294 : vector<8x128xf32>
    %296 = arith.addf %287, %295 : vector<8x128xf32>
    %297 = vector.broadcast %87 : f32 to vector<8x128xf32>
    %298 = arith.mulf %200, %297 : vector<8x128xf32>
    %299 = arith.addf %290, %298 : vector<8x128xf32>
    %300 = vector.broadcast %88 : f32 to vector<8x128xf32>
    %301 = arith.mulf %200, %300 : vector<8x128xf32>
    %302 = arith.addf %293, %301 : vector<8x128xf32>
    %303 = vector.broadcast %98 : f32 to vector<8x128xf32>
    %304 = arith.mulf %284, %303 : vector<8x128xf32>
    %305 = arith.addf %296, %304 : vector<8x128xf32>
    %306 = vector.broadcast %99 : f32 to vector<8x128xf32>
    %307 = arith.mulf %284, %306 : vector<8x128xf32>
    %308 = arith.addf %299, %307 : vector<8x128xf32>
    %309 = vector.broadcast %100 : f32 to vector<8x128xf32>
    %310 = arith.mulf %284, %309 : vector<8x128xf32>
    %311 = arith.addf %302, %310 : vector<8x128xf32>
    %c0_i32_75 = arith.constant 0 : i32
    %312 = vector.broadcast %c0_i32_75 : i32 to vector<8x128xi32>
    %313 = arith.cmpi eq, %180, %312 : vector<8x128xi32>
    %314 = vector.broadcast %131 : f32 to vector<1x128xf32>
    %315 = arith.mulf %155, %314 : vector<1x128xf32>
    %c1_i32_76 = arith.constant 1 : i32
    %316 = tpu.dynamic_rotate %128 by %c1_i32_76 dim 0 : vector<8x128xf32>, i32 -> vector<8x128xf32>
    %317 = vector.shape_cast %315 : vector<1x128xf32> to vector<1x128xf32>
    %318 = vector.broadcast %317 : vector<1x128xf32> to vector<8x128xf32>
    %319 = arith.select %313, %318, %316 : vector<8x128xi1>, vector<8x128xf32>
    %c7_i32_77 = arith.constant 7 : i32
    %320 = vector.broadcast %c7_i32_77 : i32 to vector<8x128xi32>
    %321 = arith.cmpi eq, %180, %320 : vector<8x128xi32>
    %322 = vector.broadcast %133 : f32 to vector<1x128xf32>
    %323 = arith.mulf %173, %322 : vector<1x128xf32>
    %c7_i32_78 = arith.constant 7 : i32
    %324 = tpu.dynamic_rotate %128 by %c7_i32_78 dim 0 : vector<8x128xf32>, i32 -> vector<8x128xf32>
    %325 = vector.shape_cast %323 : vector<1x128xf32> to vector<1x128xf32>
    %326 = vector.broadcast %325 : vector<1x128xf32> to vector<8x128xf32>
    %327 = arith.select %321, %326, %324 : vector<8x128xi1>, vector<8x128xf32>
    %c0_i32_79 = arith.constant 0 : i32
    %328 = vector.broadcast %c0_i32_79 : i32 to vector<8x128xi32>
    %329 = arith.cmpi eq, %181, %328 : vector<8x128xi32>
    %c1_i32_80 = arith.constant 1 : i32
    %330 = tpu.dynamic_rotate %319 by %c1_i32_80 dim 1 : vector<8x128xf32>, i32 -> vector<8x128xf32>
    %cst_81 = arith.constant 0.000000e+00 : f32
    %331 = vector.broadcast %cst_81 : f32 to vector<8x128xf32>
    %332 = arith.select %329, %331, %330 : vector<8x128xi1>, vector<8x128xf32>
    %c127_i32_82 = arith.constant 127 : i32
    %333 = vector.broadcast %c127_i32_82 : i32 to vector<8x128xi32>
    %334 = arith.cmpi eq, %181, %333 : vector<8x128xi32>
    %c127_i32_83 = arith.constant 127 : i32
    %335 = tpu.dynamic_rotate %319 by %c127_i32_83 dim 1 : vector<8x128xf32>, i32 -> vector<8x128xf32>
    %cst_84 = arith.constant 0.000000e+00 : f32
    %336 = vector.broadcast %cst_84 : f32 to vector<8x128xf32>
    %337 = arith.select %334, %336, %335 : vector<8x128xi1>, vector<8x128xf32>
    %338 = vector.broadcast %5 : f32 to vector<8x128xf32>
    %339 = arith.mulf %332, %338 : vector<8x128xf32>
    %340 = arith.addf %305, %339 : vector<8x128xf32>
    %341 = vector.broadcast %6 : f32 to vector<8x128xf32>
    %342 = arith.mulf %332, %341 : vector<8x128xf32>
    %343 = arith.addf %308, %342 : vector<8x128xf32>
    %344 = vector.broadcast %7 : f32 to vector<8x128xf32>
    %345 = arith.mulf %332, %344 : vector<8x128xf32>
    %346 = arith.addf %311, %345 : vector<8x128xf32>
    %347 = vector.broadcast %17 : f32 to vector<8x128xf32>
    %348 = arith.mulf %319, %347 : vector<8x128xf32>
    %349 = arith.addf %340, %348 : vector<8x128xf32>
    %350 = vector.broadcast %18 : f32 to vector<8x128xf32>
    %351 = arith.mulf %319, %350 : vector<8x128xf32>
    %352 = arith.addf %343, %351 : vector<8x128xf32>
    %353 = vector.broadcast %19 : f32 to vector<8x128xf32>
    %354 = arith.mulf %319, %353 : vector<8x128xf32>
    %355 = arith.addf %346, %354 : vector<8x128xf32>
    %356 = vector.broadcast %29 : f32 to vector<8x128xf32>
    %357 = arith.mulf %337, %356 : vector<8x128xf32>
    %358 = arith.addf %349, %357 : vector<8x128xf32>
    %359 = vector.broadcast %30 : f32 to vector<8x128xf32>
    %360 = arith.mulf %337, %359 : vector<8x128xf32>
    %361 = arith.addf %352, %360 : vector<8x128xf32>
    %362 = vector.broadcast %31 : f32 to vector<8x128xf32>
    %363 = arith.mulf %337, %362 : vector<8x128xf32>
    %364 = arith.addf %355, %363 : vector<8x128xf32>
    %c0_i32_85 = arith.constant 0 : i32
    %365 = vector.broadcast %c0_i32_85 : i32 to vector<8x128xi32>
    %366 = arith.cmpi eq, %181, %365 : vector<8x128xi32>
    %c1_i32_86 = arith.constant 1 : i32
    %367 = tpu.dynamic_rotate %128 by %c1_i32_86 dim 1 : vector<8x128xf32>, i32 -> vector<8x128xf32>
    %cst_87 = arith.constant 0.000000e+00 : f32
    %368 = vector.broadcast %cst_87 : f32 to vector<8x128xf32>
    %369 = arith.select %366, %368, %367 : vector<8x128xi1>, vector<8x128xf32>
    %c127_i32_88 = arith.constant 127 : i32
    %370 = vector.broadcast %c127_i32_88 : i32 to vector<8x128xi32>
    %371 = arith.cmpi eq, %181, %370 : vector<8x128xi32>
    %c127_i32_89 = arith.constant 127 : i32
    %372 = tpu.dynamic_rotate %128 by %c127_i32_89 dim 1 : vector<8x128xf32>, i32 -> vector<8x128xf32>
    %cst_90 = arith.constant 0.000000e+00 : f32
    %373 = vector.broadcast %cst_90 : f32 to vector<8x128xf32>
    %374 = arith.select %371, %373, %372 : vector<8x128xi1>, vector<8x128xf32>
    %375 = vector.broadcast %41 : f32 to vector<8x128xf32>
    %376 = arith.mulf %369, %375 : vector<8x128xf32>
    %377 = arith.addf %358, %376 : vector<8x128xf32>
    %378 = vector.broadcast %42 : f32 to vector<8x128xf32>
    %379 = arith.mulf %369, %378 : vector<8x128xf32>
    %380 = arith.addf %361, %379 : vector<8x128xf32>
    %381 = vector.broadcast %43 : f32 to vector<8x128xf32>
    %382 = arith.mulf %369, %381 : vector<8x128xf32>
    %383 = arith.addf %364, %382 : vector<8x128xf32>
    %384 = vector.broadcast %53 : f32 to vector<8x128xf32>
    %385 = arith.mulf %128, %384 : vector<8x128xf32>
    %386 = arith.addf %377, %385 : vector<8x128xf32>
    %387 = vector.broadcast %54 : f32 to vector<8x128xf32>
    %388 = arith.mulf %128, %387 : vector<8x128xf32>
    %389 = arith.addf %380, %388 : vector<8x128xf32>
    %390 = vector.broadcast %55 : f32 to vector<8x128xf32>
    %391 = arith.mulf %128, %390 : vector<8x128xf32>
    %392 = arith.addf %383, %391 : vector<8x128xf32>
    %393 = vector.broadcast %65 : f32 to vector<8x128xf32>
    %394 = arith.mulf %374, %393 : vector<8x128xf32>
    %395 = arith.addf %386, %394 : vector<8x128xf32>
    %396 = vector.broadcast %66 : f32 to vector<8x128xf32>
    %397 = arith.mulf %374, %396 : vector<8x128xf32>
    %398 = arith.addf %389, %397 : vector<8x128xf32>
    %399 = vector.broadcast %67 : f32 to vector<8x128xf32>
    %400 = arith.mulf %374, %399 : vector<8x128xf32>
    %401 = arith.addf %392, %400 : vector<8x128xf32>
    %c0_i32_91 = arith.constant 0 : i32
    %402 = vector.broadcast %c0_i32_91 : i32 to vector<8x128xi32>
    %403 = arith.cmpi eq, %181, %402 : vector<8x128xi32>
    %c1_i32_92 = arith.constant 1 : i32
    %404 = tpu.dynamic_rotate %327 by %c1_i32_92 dim 1 : vector<8x128xf32>, i32 -> vector<8x128xf32>
    %cst_93 = arith.constant 0.000000e+00 : f32
    %405 = vector.broadcast %cst_93 : f32 to vector<8x128xf32>
    %406 = arith.select %403, %405, %404 : vector<8x128xi1>, vector<8x128xf32>
    %c127_i32_94 = arith.constant 127 : i32
    %407 = vector.broadcast %c127_i32_94 : i32 to vector<8x128xi32>
    %408 = arith.cmpi eq, %181, %407 : vector<8x128xi32>
    %c127_i32_95 = arith.constant 127 : i32
    %409 = tpu.dynamic_rotate %327 by %c127_i32_95 dim 1 : vector<8x128xf32>, i32 -> vector<8x128xf32>
    %cst_96 = arith.constant 0.000000e+00 : f32
    %410 = vector.broadcast %cst_96 : f32 to vector<8x128xf32>
    %411 = arith.select %408, %410, %409 : vector<8x128xi1>, vector<8x128xf32>
    %412 = vector.broadcast %77 : f32 to vector<8x128xf32>
    %413 = arith.mulf %406, %412 : vector<8x128xf32>
    %414 = arith.addf %395, %413 : vector<8x128xf32>
    %415 = vector.broadcast %78 : f32 to vector<8x128xf32>
    %416 = arith.mulf %406, %415 : vector<8x128xf32>
    %417 = arith.addf %398, %416 : vector<8x128xf32>
    %418 = vector.broadcast %79 : f32 to vector<8x128xf32>
    %419 = arith.mulf %406, %418 : vector<8x128xf32>
    %420 = arith.addf %401, %419 : vector<8x128xf32>
    %421 = vector.broadcast %89 : f32 to vector<8x128xf32>
    %422 = arith.mulf %327, %421 : vector<8x128xf32>
    %423 = arith.addf %414, %422 : vector<8x128xf32>
    %424 = vector.broadcast %90 : f32 to vector<8x128xf32>
    %425 = arith.mulf %327, %424 : vector<8x128xf32>
    %426 = arith.addf %417, %425 : vector<8x128xf32>
    %427 = vector.broadcast %91 : f32 to vector<8x128xf32>
    %428 = arith.mulf %327, %427 : vector<8x128xf32>
    %429 = arith.addf %420, %428 : vector<8x128xf32>
    %430 = vector.broadcast %101 : f32 to vector<8x128xf32>
    %431 = arith.mulf %411, %430 : vector<8x128xf32>
    %432 = arith.addf %423, %431 : vector<8x128xf32>
    %433 = vector.broadcast %102 : f32 to vector<8x128xf32>
    %434 = arith.mulf %411, %433 : vector<8x128xf32>
    %435 = arith.addf %426, %434 : vector<8x128xf32>
    %436 = vector.broadcast %103 : f32 to vector<8x128xf32>
    %437 = arith.mulf %411, %436 : vector<8x128xf32>
    %438 = arith.addf %429, %437 : vector<8x128xf32>
    %c0_i32_97 = arith.constant 0 : i32
    %439 = vector.broadcast %c0_i32_97 : i32 to vector<8x128xi32>
    %440 = arith.cmpi eq, %180, %439 : vector<8x128xi32>
    %441 = vector.broadcast %131 : f32 to vector<1x128xf32>
    %442 = arith.mulf %161, %441 : vector<1x128xf32>
    %c1_i32_98 = arith.constant 1 : i32
    %443 = tpu.dynamic_rotate %129 by %c1_i32_98 dim 0 : vector<8x128xf32>, i32 -> vector<8x128xf32>
    %444 = vector.shape_cast %442 : vector<1x128xf32> to vector<1x128xf32>
    %445 = vector.broadcast %444 : vector<1x128xf32> to vector<8x128xf32>
    %446 = arith.select %440, %445, %443 : vector<8x128xi1>, vector<8x128xf32>
    %c7_i32_99 = arith.constant 7 : i32
    %447 = vector.broadcast %c7_i32_99 : i32 to vector<8x128xi32>
    %448 = arith.cmpi eq, %180, %447 : vector<8x128xi32>
    %449 = vector.broadcast %133 : f32 to vector<1x128xf32>
    %450 = arith.mulf %179, %449 : vector<1x128xf32>
    %c7_i32_100 = arith.constant 7 : i32
    %451 = tpu.dynamic_rotate %129 by %c7_i32_100 dim 0 : vector<8x128xf32>, i32 -> vector<8x128xf32>
    %452 = vector.shape_cast %450 : vector<1x128xf32> to vector<1x128xf32>
    %453 = vector.broadcast %452 : vector<1x128xf32> to vector<8x128xf32>
    %454 = arith.select %448, %453, %451 : vector<8x128xi1>, vector<8x128xf32>
    %c0_i32_101 = arith.constant 0 : i32
    %455 = vector.broadcast %c0_i32_101 : i32 to vector<8x128xi32>
    %456 = arith.cmpi eq, %181, %455 : vector<8x128xi32>
    %c1_i32_102 = arith.constant 1 : i32
    %457 = tpu.dynamic_rotate %446 by %c1_i32_102 dim 1 : vector<8x128xf32>, i32 -> vector<8x128xf32>
    %cst_103 = arith.constant 0.000000e+00 : f32
    %458 = vector.broadcast %cst_103 : f32 to vector<8x128xf32>
    %459 = arith.select %456, %458, %457 : vector<8x128xi1>, vector<8x128xf32>
    %c127_i32_104 = arith.constant 127 : i32
    %460 = vector.broadcast %c127_i32_104 : i32 to vector<8x128xi32>
    %461 = arith.cmpi eq, %181, %460 : vector<8x128xi32>
    %c127_i32_105 = arith.constant 127 : i32
    %462 = tpu.dynamic_rotate %446 by %c127_i32_105 dim 1 : vector<8x128xf32>, i32 -> vector<8x128xf32>
    %cst_106 = arith.constant 0.000000e+00 : f32
    %463 = vector.broadcast %cst_106 : f32 to vector<8x128xf32>
    %464 = arith.select %461, %463, %462 : vector<8x128xi1>, vector<8x128xf32>
    %465 = vector.broadcast %8 : f32 to vector<8x128xf32>
    %466 = arith.mulf %459, %465 : vector<8x128xf32>
    %467 = arith.addf %432, %466 : vector<8x128xf32>
    %468 = vector.broadcast %9 : f32 to vector<8x128xf32>
    %469 = arith.mulf %459, %468 : vector<8x128xf32>
    %470 = arith.addf %435, %469 : vector<8x128xf32>
    %471 = vector.broadcast %10 : f32 to vector<8x128xf32>
    %472 = arith.mulf %459, %471 : vector<8x128xf32>
    %473 = arith.addf %438, %472 : vector<8x128xf32>
    %474 = vector.broadcast %20 : f32 to vector<8x128xf32>
    %475 = arith.mulf %446, %474 : vector<8x128xf32>
    %476 = arith.addf %467, %475 : vector<8x128xf32>
    %477 = vector.broadcast %21 : f32 to vector<8x128xf32>
    %478 = arith.mulf %446, %477 : vector<8x128xf32>
    %479 = arith.addf %470, %478 : vector<8x128xf32>
    %480 = vector.broadcast %22 : f32 to vector<8x128xf32>
    %481 = arith.mulf %446, %480 : vector<8x128xf32>
    %482 = arith.addf %473, %481 : vector<8x128xf32>
    %483 = vector.broadcast %32 : f32 to vector<8x128xf32>
    %484 = arith.mulf %464, %483 : vector<8x128xf32>
    %485 = arith.addf %476, %484 : vector<8x128xf32>
    %486 = vector.broadcast %33 : f32 to vector<8x128xf32>
    %487 = arith.mulf %464, %486 : vector<8x128xf32>
    %488 = arith.addf %479, %487 : vector<8x128xf32>
    %489 = vector.broadcast %34 : f32 to vector<8x128xf32>
    %490 = arith.mulf %464, %489 : vector<8x128xf32>
    %491 = arith.addf %482, %490 : vector<8x128xf32>
    %c0_i32_107 = arith.constant 0 : i32
    %492 = vector.broadcast %c0_i32_107 : i32 to vector<8x128xi32>
    %493 = arith.cmpi eq, %181, %492 : vector<8x128xi32>
    %c1_i32_108 = arith.constant 1 : i32
    %494 = tpu.dynamic_rotate %129 by %c1_i32_108 dim 1 : vector<8x128xf32>, i32 -> vector<8x128xf32>
    %cst_109 = arith.constant 0.000000e+00 : f32
    %495 = vector.broadcast %cst_109 : f32 to vector<8x128xf32>
    %496 = arith.select %493, %495, %494 : vector<8x128xi1>, vector<8x128xf32>
    %c127_i32_110 = arith.constant 127 : i32
    %497 = vector.broadcast %c127_i32_110 : i32 to vector<8x128xi32>
    %498 = arith.cmpi eq, %181, %497 : vector<8x128xi32>
    %c127_i32_111 = arith.constant 127 : i32
    %499 = tpu.dynamic_rotate %129 by %c127_i32_111 dim 1 : vector<8x128xf32>, i32 -> vector<8x128xf32>
    %cst_112 = arith.constant 0.000000e+00 : f32
    %500 = vector.broadcast %cst_112 : f32 to vector<8x128xf32>
    %501 = arith.select %498, %500, %499 : vector<8x128xi1>, vector<8x128xf32>
    %502 = vector.broadcast %44 : f32 to vector<8x128xf32>
    %503 = arith.mulf %496, %502 : vector<8x128xf32>
    %504 = arith.addf %485, %503 : vector<8x128xf32>
    %505 = vector.broadcast %45 : f32 to vector<8x128xf32>
    %506 = arith.mulf %496, %505 : vector<8x128xf32>
    %507 = arith.addf %488, %506 : vector<8x128xf32>
    %508 = vector.broadcast %46 : f32 to vector<8x128xf32>
    %509 = arith.mulf %496, %508 : vector<8x128xf32>
    %510 = arith.addf %491, %509 : vector<8x128xf32>
    %511 = vector.broadcast %56 : f32 to vector<8x128xf32>
    %512 = arith.mulf %129, %511 : vector<8x128xf32>
    %513 = arith.addf %504, %512 : vector<8x128xf32>
    %514 = vector.broadcast %57 : f32 to vector<8x128xf32>
    %515 = arith.mulf %129, %514 : vector<8x128xf32>
    %516 = arith.addf %507, %515 : vector<8x128xf32>
    %517 = vector.broadcast %58 : f32 to vector<8x128xf32>
    %518 = arith.mulf %129, %517 : vector<8x128xf32>
    %519 = arith.addf %510, %518 : vector<8x128xf32>
    %520 = vector.broadcast %68 : f32 to vector<8x128xf32>
    %521 = arith.mulf %501, %520 : vector<8x128xf32>
    %522 = arith.addf %513, %521 : vector<8x128xf32>
    %523 = vector.broadcast %69 : f32 to vector<8x128xf32>
    %524 = arith.mulf %501, %523 : vector<8x128xf32>
    %525 = arith.addf %516, %524 : vector<8x128xf32>
    %526 = vector.broadcast %70 : f32 to vector<8x128xf32>
    %527 = arith.mulf %501, %526 : vector<8x128xf32>
    %528 = arith.addf %519, %527 : vector<8x128xf32>
    %c0_i32_113 = arith.constant 0 : i32
    %529 = vector.broadcast %c0_i32_113 : i32 to vector<8x128xi32>
    %530 = arith.cmpi eq, %181, %529 : vector<8x128xi32>
    %c1_i32_114 = arith.constant 1 : i32
    %531 = tpu.dynamic_rotate %454 by %c1_i32_114 dim 1 : vector<8x128xf32>, i32 -> vector<8x128xf32>
    %cst_115 = arith.constant 0.000000e+00 : f32
    %532 = vector.broadcast %cst_115 : f32 to vector<8x128xf32>
    %533 = arith.select %530, %532, %531 : vector<8x128xi1>, vector<8x128xf32>
    %c127_i32_116 = arith.constant 127 : i32
    %534 = vector.broadcast %c127_i32_116 : i32 to vector<8x128xi32>
    %535 = arith.cmpi eq, %181, %534 : vector<8x128xi32>
    %c127_i32_117 = arith.constant 127 : i32
    %536 = tpu.dynamic_rotate %454 by %c127_i32_117 dim 1 : vector<8x128xf32>, i32 -> vector<8x128xf32>
    %cst_118 = arith.constant 0.000000e+00 : f32
    %537 = vector.broadcast %cst_118 : f32 to vector<8x128xf32>
    %538 = arith.select %535, %537, %536 : vector<8x128xi1>, vector<8x128xf32>
    %539 = vector.broadcast %80 : f32 to vector<8x128xf32>
    %540 = arith.mulf %533, %539 : vector<8x128xf32>
    %541 = arith.addf %522, %540 : vector<8x128xf32>
    %542 = vector.broadcast %81 : f32 to vector<8x128xf32>
    %543 = arith.mulf %533, %542 : vector<8x128xf32>
    %544 = arith.addf %525, %543 : vector<8x128xf32>
    %545 = vector.broadcast %82 : f32 to vector<8x128xf32>
    %546 = arith.mulf %533, %545 : vector<8x128xf32>
    %547 = arith.addf %528, %546 : vector<8x128xf32>
    %548 = vector.broadcast %92 : f32 to vector<8x128xf32>
    %549 = arith.mulf %454, %548 : vector<8x128xf32>
    %550 = arith.addf %541, %549 : vector<8x128xf32>
    %551 = vector.broadcast %93 : f32 to vector<8x128xf32>
    %552 = arith.mulf %454, %551 : vector<8x128xf32>
    %553 = arith.addf %544, %552 : vector<8x128xf32>
    %554 = vector.broadcast %94 : f32 to vector<8x128xf32>
    %555 = arith.mulf %454, %554 : vector<8x128xf32>
    %556 = arith.addf %547, %555 : vector<8x128xf32>
    %557 = vector.broadcast %104 : f32 to vector<8x128xf32>
    %558 = arith.mulf %538, %557 : vector<8x128xf32>
    %559 = arith.addf %550, %558 : vector<8x128xf32>
    %560 = vector.broadcast %105 : f32 to vector<8x128xf32>
    %561 = arith.mulf %538, %560 : vector<8x128xf32>
    %562 = arith.addf %553, %561 : vector<8x128xf32>
    %563 = vector.broadcast %106 : f32 to vector<8x128xf32>
    %564 = arith.mulf %538, %563 : vector<8x128xf32>
    %565 = arith.addf %556, %564 : vector<8x128xf32>
    %c0_i32_119 = arith.constant 0 : i32
    %566 = vector.broadcast %c0_i32_119 : i32 to vector<8x128xi32>
    %567 = arith.cmpi eq, %180, %566 : vector<8x128xi32>
    %568 = vector.broadcast %131 : f32 to vector<1x128xf32>
    %569 = arith.mulf %140, %568 : vector<1x128xf32>
    %c1_i32_120 = arith.constant 1 : i32
    %570 = tpu.dynamic_rotate %115 by %c1_i32_120 dim 0 : vector<8x128xf32>, i32 -> vector<8x128xf32>
    %571 = vector.shape_cast %569 : vector<1x128xf32> to vector<1x128xf32>
    %572 = vector.broadcast %571 : vector<1x128xf32> to vector<8x128xf32>
    %573 = arith.select %567, %572, %570 : vector<8x128xi1>, vector<8x128xf32>
    %c7_i32_121 = arith.constant 7 : i32
    %574 = vector.broadcast %c7_i32_121 : i32 to vector<8x128xi32>
    %575 = arith.cmpi eq, %180, %574 : vector<8x128xi32>
    %576 = vector.broadcast %133 : f32 to vector<1x128xf32>
    %577 = arith.mulf %143, %576 : vector<1x128xf32>
    %c7_i32_122 = arith.constant 7 : i32
    %578 = tpu.dynamic_rotate %115 by %c7_i32_122 dim 0 : vector<8x128xf32>, i32 -> vector<8x128xf32>
    %579 = vector.shape_cast %577 : vector<1x128xf32> to vector<1x128xf32>
    %580 = vector.broadcast %579 : vector<1x128xf32> to vector<8x128xf32>
    %581 = arith.select %575, %580, %578 : vector<8x128xi1>, vector<8x128xf32>
    %c0_i32_123 = arith.constant 0 : i32
    %582 = vector.broadcast %c0_i32_123 : i32 to vector<8x128xi32>
    %583 = arith.cmpi eq, %181, %582 : vector<8x128xi32>
    %c1_i32_124 = arith.constant 1 : i32
    %584 = tpu.dynamic_rotate %573 by %c1_i32_124 dim 1 : vector<8x128xf32>, i32 -> vector<8x128xf32>
    %cst_125 = arith.constant 0.000000e+00 : f32
    %585 = vector.broadcast %cst_125 : f32 to vector<8x128xf32>
    %586 = arith.select %583, %585, %584 : vector<8x128xi1>, vector<8x128xf32>
    %c127_i32_126 = arith.constant 127 : i32
    %587 = vector.broadcast %c127_i32_126 : i32 to vector<8x128xi32>
    %588 = arith.cmpi eq, %181, %587 : vector<8x128xi32>
    %c127_i32_127 = arith.constant 127 : i32
    %589 = tpu.dynamic_rotate %573 by %c127_i32_127 dim 1 : vector<8x128xf32>, i32 -> vector<8x128xf32>
    %cst_128 = arith.constant 0.000000e+00 : f32
    %590 = vector.broadcast %cst_128 : f32 to vector<8x128xf32>
    %591 = arith.select %588, %590, %589 : vector<8x128xi1>, vector<8x128xf32>
    %592 = vector.broadcast %11 : f32 to vector<8x128xf32>
    %593 = arith.mulf %586, %592 : vector<8x128xf32>
    %594 = arith.addf %559, %593 : vector<8x128xf32>
    %595 = vector.broadcast %12 : f32 to vector<8x128xf32>
    %596 = arith.mulf %586, %595 : vector<8x128xf32>
    %597 = arith.addf %562, %596 : vector<8x128xf32>
    %598 = vector.broadcast %13 : f32 to vector<8x128xf32>
    %599 = arith.mulf %586, %598 : vector<8x128xf32>
    %600 = arith.addf %565, %599 : vector<8x128xf32>
    %601 = vector.broadcast %23 : f32 to vector<8x128xf32>
    %602 = arith.mulf %573, %601 : vector<8x128xf32>
    %603 = arith.addf %594, %602 : vector<8x128xf32>
    %604 = vector.broadcast %24 : f32 to vector<8x128xf32>
    %605 = arith.mulf %573, %604 : vector<8x128xf32>
    %606 = arith.addf %597, %605 : vector<8x128xf32>
    %607 = vector.broadcast %25 : f32 to vector<8x128xf32>
    %608 = arith.mulf %573, %607 : vector<8x128xf32>
    %609 = arith.addf %600, %608 : vector<8x128xf32>
    %610 = vector.broadcast %35 : f32 to vector<8x128xf32>
    %611 = arith.mulf %591, %610 : vector<8x128xf32>
    %612 = arith.addf %603, %611 : vector<8x128xf32>
    %613 = vector.broadcast %36 : f32 to vector<8x128xf32>
    %614 = arith.mulf %591, %613 : vector<8x128xf32>
    %615 = arith.addf %606, %614 : vector<8x128xf32>
    %616 = vector.broadcast %37 : f32 to vector<8x128xf32>
    %617 = arith.mulf %591, %616 : vector<8x128xf32>
    %618 = arith.addf %609, %617 : vector<8x128xf32>
    %c0_i32_129 = arith.constant 0 : i32
    %619 = vector.broadcast %c0_i32_129 : i32 to vector<8x128xi32>
    %620 = arith.cmpi eq, %181, %619 : vector<8x128xi32>
    %c1_i32_130 = arith.constant 1 : i32
    %621 = tpu.dynamic_rotate %115 by %c1_i32_130 dim 1 : vector<8x128xf32>, i32 -> vector<8x128xf32>
    %cst_131 = arith.constant 0.000000e+00 : f32
    %622 = vector.broadcast %cst_131 : f32 to vector<8x128xf32>
    %623 = arith.select %620, %622, %621 : vector<8x128xi1>, vector<8x128xf32>
    %c127_i32_132 = arith.constant 127 : i32
    %624 = vector.broadcast %c127_i32_132 : i32 to vector<8x128xi32>
    %625 = arith.cmpi eq, %181, %624 : vector<8x128xi32>
    %c127_i32_133 = arith.constant 127 : i32
    %626 = tpu.dynamic_rotate %115 by %c127_i32_133 dim 1 : vector<8x128xf32>, i32 -> vector<8x128xf32>
    %cst_134 = arith.constant 0.000000e+00 : f32
    %627 = vector.broadcast %cst_134 : f32 to vector<8x128xf32>
    %628 = arith.select %625, %627, %626 : vector<8x128xi1>, vector<8x128xf32>
    %629 = vector.broadcast %47 : f32 to vector<8x128xf32>
    %630 = arith.mulf %623, %629 : vector<8x128xf32>
    %631 = arith.addf %612, %630 : vector<8x128xf32>
    %632 = vector.broadcast %48 : f32 to vector<8x128xf32>
    %633 = arith.mulf %623, %632 : vector<8x128xf32>
    %634 = arith.addf %615, %633 : vector<8x128xf32>
    %635 = vector.broadcast %49 : f32 to vector<8x128xf32>
    %636 = arith.mulf %623, %635 : vector<8x128xf32>
    %637 = arith.addf %618, %636 : vector<8x128xf32>
    %638 = vector.broadcast %59 : f32 to vector<8x128xf32>
    %639 = arith.mulf %115, %638 : vector<8x128xf32>
    %640 = arith.addf %631, %639 : vector<8x128xf32>
    %641 = vector.broadcast %60 : f32 to vector<8x128xf32>
    %642 = arith.mulf %115, %641 : vector<8x128xf32>
    %643 = arith.addf %634, %642 : vector<8x128xf32>
    %644 = vector.broadcast %61 : f32 to vector<8x128xf32>
    %645 = arith.mulf %115, %644 : vector<8x128xf32>
    %646 = arith.addf %637, %645 : vector<8x128xf32>
    %647 = vector.broadcast %71 : f32 to vector<8x128xf32>
    %648 = arith.mulf %628, %647 : vector<8x128xf32>
    %649 = arith.addf %640, %648 : vector<8x128xf32>
    %650 = vector.broadcast %72 : f32 to vector<8x128xf32>
    %651 = arith.mulf %628, %650 : vector<8x128xf32>
    %652 = arith.addf %643, %651 : vector<8x128xf32>
    %653 = vector.broadcast %73 : f32 to vector<8x128xf32>
    %654 = arith.mulf %628, %653 : vector<8x128xf32>
    %655 = arith.addf %646, %654 : vector<8x128xf32>
    %c0_i32_135 = arith.constant 0 : i32
    %656 = vector.broadcast %c0_i32_135 : i32 to vector<8x128xi32>
    %657 = arith.cmpi eq, %181, %656 : vector<8x128xi32>
    %c1_i32_136 = arith.constant 1 : i32
    %658 = tpu.dynamic_rotate %581 by %c1_i32_136 dim 1 : vector<8x128xf32>, i32 -> vector<8x128xf32>
    %cst_137 = arith.constant 0.000000e+00 : f32
    %659 = vector.broadcast %cst_137 : f32 to vector<8x128xf32>
    %660 = arith.select %657, %659, %658 : vector<8x128xi1>, vector<8x128xf32>
    %c127_i32_138 = arith.constant 127 : i32
    %661 = vector.broadcast %c127_i32_138 : i32 to vector<8x128xi32>
    %662 = arith.cmpi eq, %181, %661 : vector<8x128xi32>
    %c127_i32_139 = arith.constant 127 : i32
    %663 = tpu.dynamic_rotate %581 by %c127_i32_139 dim 1 : vector<8x128xf32>, i32 -> vector<8x128xf32>
    %cst_140 = arith.constant 0.000000e+00 : f32
    %664 = vector.broadcast %cst_140 : f32 to vector<8x128xf32>
    %665 = arith.select %662, %664, %663 : vector<8x128xi1>, vector<8x128xf32>
    %666 = vector.broadcast %83 : f32 to vector<8x128xf32>
    %667 = arith.mulf %660, %666 : vector<8x128xf32>
    %668 = arith.addf %649, %667 : vector<8x128xf32>
    %669 = vector.broadcast %84 : f32 to vector<8x128xf32>
    %670 = arith.mulf %660, %669 : vector<8x128xf32>
    %671 = arith.addf %652, %670 : vector<8x128xf32>
    %672 = vector.broadcast %85 : f32 to vector<8x128xf32>
    %673 = arith.mulf %660, %672 : vector<8x128xf32>
    %674 = arith.addf %655, %673 : vector<8x128xf32>
    %675 = vector.broadcast %95 : f32 to vector<8x128xf32>
    %676 = arith.mulf %581, %675 : vector<8x128xf32>
    %677 = arith.addf %668, %676 : vector<8x128xf32>
    %678 = vector.broadcast %96 : f32 to vector<8x128xf32>
    %679 = arith.mulf %581, %678 : vector<8x128xf32>
    %680 = arith.addf %671, %679 : vector<8x128xf32>
    %681 = vector.broadcast %97 : f32 to vector<8x128xf32>
    %682 = arith.mulf %581, %681 : vector<8x128xf32>
    %683 = arith.addf %674, %682 : vector<8x128xf32>
    %684 = vector.broadcast %107 : f32 to vector<8x128xf32>
    %685 = arith.mulf %665, %684 : vector<8x128xf32>
    %686 = arith.addf %677, %685 : vector<8x128xf32>
    %687 = vector.broadcast %108 : f32 to vector<8x128xf32>
    %688 = arith.mulf %665, %687 : vector<8x128xf32>
    %689 = arith.addf %680, %688 : vector<8x128xf32>
    %690 = vector.broadcast %109 : f32 to vector<8x128xf32>
    %691 = arith.mulf %665, %690 : vector<8x128xf32>
    %692 = arith.addf %683, %691 : vector<8x128xf32>
    %693 = vector.broadcast %110 : f32 to vector<8x128xf32>
    %694 = arith.addf %686, %693 : vector<8x128xf32>
    %695 = arith.negf %694 : vector<8x128xf32>
    %696 = math.exp %695 : vector<8x128xf32>
    %cst_141 = arith.constant 1.000000e+00 : f32
    %697 = vector.broadcast %cst_141 : f32 to vector<8x128xf32>
    %698 = arith.addf %697, %696 : vector<8x128xf32>
    %699 = arith.divf %697, %698 : vector<8x128xf32>
    %700 = arith.mulf %115, %699 : vector<8x128xf32>
    %701 = arith.addf %700, %127 : vector<8x128xf32>
    %cst_142 = arith.constant 2.550000e+02 : f32
    %702 = vector.broadcast %cst_142 : f32 to vector<8x128xf32>
    %703 = arith.mulf %701, %702 : vector<8x128xf32>
    %cst_143 = arith.constant 0.000000e+00 : f32
    %cst_144 = arith.constant 2.550000e+02 : f32
    %704 = vector.broadcast %cst_143 : f32 to vector<8x128xf32>
    %705 = arith.maximumf %704, %703 : vector<8x128xf32>
    %706 = vector.broadcast %cst_144 : f32 to vector<8x128xf32>
    %707 = arith.minimumf %706, %705 : vector<8x128xf32>
    %c0_145 = arith.constant 0 : index
    %c0_146 = arith.constant 0 : index
    %c0_147 = arith.constant 0 : index
    %c0_148 = arith.constant 0 : index
    %708 = vector.load %arg6[%c0_145, %c0_146, %c0_147, %c0_148] : memref<1x3x8x128xf32, #tpu.memory_space<vmem>>, vector<1x1x8x128xf32>
    %709 = vector.shape_cast %708 : vector<1x1x8x128xf32> to vector<8x128xf32>
    %710 = vector.shape_cast %707 : vector<8x128xf32> to vector<1x1x8x128xf32>
    tpu.vector_store %arg6[%c0_145, %c0_146, %c0_147, %c0_148], %710 {strides = array<i32>} : memref<1x3x8x128xf32, #tpu.memory_space<vmem>>, vector<1x1x8x128xf32>,
    %711 = vector.broadcast %111 : f32 to vector<8x128xf32>
    %712 = arith.addf %689, %711 : vector<8x128xf32>
    %713 = arith.negf %712 : vector<8x128xf32>
    %714 = math.exp %713 : vector<8x128xf32>
    %cst_149 = arith.constant 1.000000e+00 : f32
    %715 = vector.broadcast %cst_149 : f32 to vector<8x128xf32>
    %716 = arith.addf %715, %714 : vector<8x128xf32>
    %717 = arith.divf %715, %716 : vector<8x128xf32>
    %718 = arith.mulf %115, %717 : vector<8x128xf32>
    %719 = arith.addf %718, %128 : vector<8x128xf32>
    %cst_150 = arith.constant 2.550000e+02 : f32
    %720 = vector.broadcast %cst_150 : f32 to vector<8x128xf32>
    %721 = arith.mulf %719, %720 : vector<8x128xf32>
    %cst_151 = arith.constant 0.000000e+00 : f32
    %cst_152 = arith.constant 2.550000e+02 : f32
    %722 = vector.broadcast %cst_151 : f32 to vector<8x128xf32>
    %723 = arith.maximumf %722, %721 : vector<8x128xf32>
    %724 = vector.broadcast %cst_152 : f32 to vector<8x128xf32>
    %725 = arith.minimumf %724, %723 : vector<8x128xf32>
    %c0_153 = arith.constant 0 : index
    %c1_154 = arith.constant 1 : index
    %c0_155 = arith.constant 0 : index
    %c0_156 = arith.constant 0 : index
    %726 = vector.load %arg6[%c0_153, %c1_154, %c0_155, %c0_156] : memref<1x3x8x128xf32, #tpu.memory_space<vmem>>, vector<1x1x8x128xf32>
    %727 = vector.shape_cast %726 : vector<1x1x8x128xf32> to vector<8x128xf32>
    %728 = vector.shape_cast %725 : vector<8x128xf32> to vector<1x1x8x128xf32>
    tpu.vector_store %arg6[%c0_153, %c1_154, %c0_155, %c0_156], %728 {strides = array<i32>} : memref<1x3x8x128xf32, #tpu.memory_space<vmem>>, vector<1x1x8x128xf32>,
    %729 = vector.broadcast %112 : f32 to vector<8x128xf32>
    %730 = arith.addf %692, %729 : vector<8x128xf32>
    %731 = arith.negf %730 : vector<8x128xf32>
    %732 = math.exp %731 : vector<8x128xf32>
    %cst_157 = arith.constant 1.000000e+00 : f32
    %733 = vector.broadcast %cst_157 : f32 to vector<8x128xf32>
    %734 = arith.addf %733, %732 : vector<8x128xf32>
    %735 = arith.divf %733, %734 : vector<8x128xf32>
    %736 = arith.mulf %115, %735 : vector<8x128xf32>
    %737 = arith.addf %736, %129 : vector<8x128xf32>
    %cst_158 = arith.constant 2.550000e+02 : f32
    %738 = vector.broadcast %cst_158 : f32 to vector<8x128xf32>
    %739 = arith.mulf %737, %738 : vector<8x128xf32>
    %cst_159 = arith.constant 0.000000e+00 : f32
    %cst_160 = arith.constant 2.550000e+02 : f32
    %740 = vector.broadcast %cst_159 : f32 to vector<8x128xf32>
    %741 = arith.maximumf %740, %739 : vector<8x128xf32>
    %742 = vector.broadcast %cst_160 : f32 to vector<8x128xf32>
    %743 = arith.minimumf %742, %741 : vector<8x128xf32>
    %c0_161 = arith.constant 0 : index
    %c2_162 = arith.constant 2 : index
    %c0_163 = arith.constant 0 : index
    %c0_164 = arith.constant 0 : index
    %744 = vector.load %arg6[%c0_161, %c2_162, %c0_163, %c0_164] : memref<1x3x8x128xf32, #tpu.memory_space<vmem>>, vector<1x1x8x128xf32>
    %745 = vector.shape_cast %744 : vector<1x1x8x128xf32> to vector<8x128xf32>
    %746 = vector.shape_cast %743 : vector<8x128xf32> to vector<1x1x8x128xf32>
    tpu.vector_store %arg6[%c0_161, %c2_162, %c0_163, %c0_164], %746 {strides = array<i32>} : memref<1x3x8x128xf32, #tpu.memory_space<vmem>>, vector<1x1x8x128xf32>,
    return
  }
  func.func @transform_0(%arg0: i32, %arg1: i32) -> (i32, i32, i32, i32) {
    %c0_i32 = arith.constant 0 : i32
    %c0_i32_0 = arith.constant 0 : i32
    %c0_i32_1 = arith.constant 0 : i32
    %c0_i32_2 = arith.constant 0 : i32
    return %arg0, %c0_i32, %c0_i32_0, %c0_i32_1 : i32, i32, i32, i32
  }
  func.func @transform_1(%arg0: i32, %arg1: i32) -> (i32, i32, i32, i32) {
    %c0_i32 = arith.constant 0 : i32
    %c0_i32_0 = arith.constant 0 : i32
    %c0_i32_1 = arith.constant 0 : i32
    %c0_i32_2 = arith.constant 0 : i32
    return %arg0, %c0_i32, %c0_i32_0, %c0_i32_1 : i32, i32, i32, i32
  }
  func.func @transform_2(%arg0: i32, %arg1: i32) -> i32 {
    %c0_i32 = arith.constant 0 : i32
    %c0_i32_0 = arith.constant 0 : i32
    return %c0_i32 : i32
  }
  func.func @transform_3(%arg0: i32, %arg1: i32) -> i32 {
    %c0_i32 = arith.constant 0 : i32
    %c0_i32_0 = arith.constant 0 : i32
    return %c0_i32 : i32
  }
  func.func @transform_4(%arg0: i32, %arg1: i32) -> (i32, i32, i32, i32) {
    %c0_i32 = arith.constant 0 : i32
    %c0_i32_0 = arith.constant 0 : i32
    %c0_i32_1 = arith.constant 0 : i32
    return %arg0, %c0_i32, %arg1, %c0_i32_0 : i32, i32, i32, i32
  }
}

</mosaic_0001>

<llo_original>
// kernel: tpu_custom_call.1
$region0: #{tpu_custom_call.1}
  #allocation0 [shape = 'u32[]', space=smem, size = 0x4, offset = 0x4, fixed_abs, tag = 'smem constant byte address 0x4 - core index']
  #allocation1 [shape = 'u32[144,128]{1,0:T(1,128)}', space=vmem, size = 0x12000, scoped, tag = 'internal scratch']
  %s0 = inlined_call_operand.hbm [shape: f32[2,3,16,128], index: 0, kind: input, shape index: {}]
  %s1 = inlined_call_operand.hbm [shape: f32[2,1,16,128], index: 1, kind: input, shape index: {}]
  %s2 = inlined_call_operand.vmem [shape: f32[108], index: 2, kind: input, shape index: {}]
  %s3 = inlined_call_operand.vmem [shape: f32[3], index: 3, kind: input, shape index: {}]
  %s4 = inlined_call_operand.hbm [shape: f32[2,3,16,128], index: 4, kind: output, shape index: {}]
  %s5 = sld [smem:[#allocation0]]
  $region65: #{tpu_custom_call.1} parent=0
    _
  %s7 = ssub.s32 1, %s5
  %s8 = scalar_select 0, %s7, %s5
  $region1: #{tpu_custom_call.1} parent=0
    #allocation2 [shape = 'u8[49152]{0}', space=vmem, size = 0xc000, scoped, tag = 'input window, operand 0']
    #allocation3 [shape = 's32[2]{0}', space=sflag, size = 0x8, scoped, tag = 'scoped memory for tpu_custom_call.1']
    #allocation4 [shape = 's32[2]{0}', space=sflag, size = 0x8, scoped, tag = 'scoped memory for tpu_custom_call.1']
    #allocation5 [shape = 's32[2]{0}', space=sflag, size = 0x8, scoped, tag = 'scoped memory for tpu_custom_call.1']
    #allocation6 [shape = 'u8[16384]{0}', space=vmem, size = 0x4000, scoped, tag = 'input window, operand 1']
    #allocation7 [shape = 's32[2]{0}', space=sflag, size = 0x8, scoped, tag = 'scoped memory for tpu_custom_call.1']
    #allocation8 [shape = 'u8[512]{0}', space=smem, size = 0x200, scoped, tag = 'input window, operand 2, single buffered']
    #allocation9 [shape = 'u8[512]{0}', space=smem, size = 0x200, scoped, tag = 'input window, operand 3, single buffered']
    #allocation10 [shape = 's32[1]{0}', space=sflag, size = 0x4, scoped, tag = 'scoped memory for tpu_custom_call.1']
    #allocation11 [shape = 'u8[24576]{0}', space=vmem, size = 0x6000, scoped, tag = 'output window, operand 0']
    %9 = vsyncpa [#allocation3], 0
    %s10 = scalar_lea.sflag [#allocation3], 1
    %11 = vsyncpa %s10, 0
    %12 = vsyncpa [#allocation7], 0
    %s13 = scalar_lea.sflag [#allocation7], 1
    %14 = vsyncpa %s13, 0
    %15 = vsyncpa [#allocation5], 0
    %16 = vsyncpa [#allocation10], 0
    %17 = vsyncpa [#allocation4], 0
    %s18 = scalar_lea.sflag [#allocation4], 1
    %19 = vsyncpa %s18, 0
    loop: start=0, step=1, limit=6
    $region2: #{tpu_custom_call.1} parent=1 // loop_pre_header
      _
    $region3: #{tpu_custom_call.1} parent=1 // loop_header
      %s21 = sphi 0, %s25
      %p22 = scmp.ge.s32.totalorder %s21, 6
      %s28 = sphi 0, %s40
      %s29 = sphi 0, %s36
      %s30 = sphi 0, %s28
      %s31 = sphi 0, %s29
      %s32 = sphi 0, %s30
      %s33 = sphi 0, %s31
      %s43 = sphi 0, %s45
      %s46 = sphi 0, %s43
      %s47 = sphi 0, %s46
      %s63 = sphi 0, %s47
      %s69 = sphi 0, %s71
      %s72 = sphi 0, %s69
      %s73 = sphi 0, %s72
      %s89 = sphi 0, %s73
      %s93 = sphi 0, %s93
      %s95 = sphi 0, %s93
      %s96 = sphi 0, %s95
      %s110 = sphi 0, %s96
      %s114 = sphi 0, %s114
      %s116 = sphi 0, %s114
      %s117 = sphi 0, %s116
      %s131 = sphi 0, %s117
      %s139 = sphi 0, %s141
      %s142 = sphi 0, %s139
      %s143 = sphi 0, %s142
      %s159 = sphi 0, %s143
    $region4: #{tpu_custom_call.1} parent=1 // loop_header_branch
      %24 = sbr.rel (%p22) target = $region8
    $region5: #{tpu_custom_call.1} parent=1 // loop_body
      %s26 = ssub.s32 %s21, 1
      %s27 = ssub.s32 %s21, 2
      %s34 = sadd.s32 1, %s29
      %p35 = scmp.ge.s32.totalorder %s34, 2
      %s36 = scalar_select %p35, 0, %s34
      %s37 = sadd.s32 1, %s28
      %s38 = scalar_select %p35, %s37, %s28
      %p39 = scmp.ge.s32.totalorder %s38, 2
      %s40 = scalar_select %p39, 0, %s38
      %s41 = ssub.s32 %s28, %s40
      %p42 = scmp.eq.s32.totalorder %s41, 0
      %s44 = sadd.s32 %s43, 1
      %s45 = scalar_select %p42, %s43, %s44
      %p48 = pneg %p42
      %p49 = scmp.eq.s32.totalorder %s21, 3
      %p50 = por %p48, %p49
      %p51 = scmp.ne.s32.totalorder %s43, %s46
      %p52 = scmp.eq.s32.totalorder %s21, 0
      %p53 = por %p51, %p52
      %p54 = scmp.ne.s32.totalorder %s43, %s46
      %p55 = scmp.eq.s32.totalorder %s26, 3
      %p56 = por %p54, %p55
      %p57 = scmp.ne.s32.totalorder %s46, %s47
      %p58 = scmp.eq.s32.totalorder %s26, 0
      %p59 = por %p57, %p58
      %p60 = scmp.ne.s32.totalorder %s46, %s47
      %p61 = scmp.eq.s32.totalorder %s27, 3
      %p62 = por %p60, %p61
      %p64 = scmp.ne.s32.totalorder %s47, %s63
      %p65 = scmp.eq.s32.totalorder %s27, 0
      %p66 = por %p64, %p65
      %s67 = ssub.s32 %s28, %s40
      %p68 = scmp.eq.s32.totalorder %s67, 0
      %s70 = sadd.s32 %s69, 1
      %s71 = scalar_select %p68, %s69, %s70
      %p74 = pneg %p68
      %p75 = scmp.eq.s32.totalorder %s21, 3
      %p76 = por %p74, %p75
      %p77 = scmp.ne.s32.totalorder %s69, %s72
      %p78 = scmp.eq.s32.totalorder %s21, 0
      %p79 = por %p77, %p78
      %p80 = scmp.ne.s32.totalorder %s69, %s72
      %p81 = scmp.eq.s32.totalorder %s26, 3
      %p82 = por %p80, %p81
      %p83 = scmp.ne.s32.totalorder %s72, %s73
      %p84 = scmp.eq.s32.totalorder %s26, 0
      %p85 = por %p83, %p84
      %p86 = scmp.ne.s32.totalorder %s72, %s73
      %p87 = scmp.eq.s32.totalorder %s27, 3
      %p88 = por %p86, %p87
      %p90 = scmp.ne.s32.totalorder %s73, %s89
      %p91 = scmp.eq.s32.totalorder %s27, 0
      %p92 = por %p90, %p91
      %s94 = sadd.s32 %s93, 1
      %p97 = scmp.eq.s32.totalorder %s21, 3
      %p98 = scmp.ne.s32.totalorder %s93, %s95
      %p99 = scmp.eq.s32.totalorder %s21, 0
      %p100 = por %p98, %p99
      %p101 = scmp.ne.s32.totalorder %s93, %s95
      %p102 = scmp.eq.s32.totalorder %s26, 3
      %p103 = por %p101, %p102
      %p104 = scmp.ne.s32.totalorder %s95, %s96
      %p105 = scmp.eq.s32.totalorder %s26, 0
      %p106 = por %p104, %p105
      %p107 = scmp.ne.s32.totalorder %s95, %s96
      %p108 = scmp.eq.s32.totalorder %s27, 3
      %p109 = por %p107, %p108
      %p111 = scmp.ne.s32.totalorder %s96, %s110
      %p112 = scmp.eq.s32.totalorder %s27, 0
      %p113 = por %p111, %p112
      %s115 = sadd.s32 %s114, 1
      %p118 = scmp.eq.s32.totalorder %s21, 3
      %p119 = scmp.ne.s32.totalorder %s114, %s116
      %p120 = scmp.eq.s32.totalorder %s21, 0
      %p121 = por %p119, %p120
      %p122 = scmp.ne.s32.totalorder %s114, %s116
      %p123 = scmp.eq.s32.totalorder %s26, 3
      %p124 = por %p122, %p123
      %p125 = scmp.ne.s32.totalorder %s116, %s117
      %p126 = scmp.eq.s32.totalorder %s26, 0
      %p127 = por %p125, %p126
      %p128 = scmp.ne.s32.totalorder %s116, %s117
      %p129 = scmp.eq.s32.totalorder %s27, 3
      %p130 = por %p128, %p129
      %p132 = scmp.ne.s32.totalorder %s117, %s131
      %p133 = scmp.eq.s32.totalorder %s27, 0
      %p134 = por %p132, %p133
      %s135 = ssub.s32 %s28, %s40
      %s136 = ssub.s32 %s29, %s36
      %s137 = sor.u32 %s135, %s136
      %p138 = scmp.eq.s32.totalorder %s137, 0
      %s140 = sadd.s32 %s139, 1
      %s141 = scalar_select %p138, %s139, %s140
      %p144 = pneg %p138
      %p145 = scmp.eq.s32.totalorder %s21, 3
      %p146 = por %p144, %p145
      %p147 = scmp.ne.s32.totalorder %s139, %s142
      %p148 = scmp.eq.s32.totalorder %s21, 0
      %p149 = por %p147, %p148
      %p150 = scmp.ne.s32.totalorder %s139, %s142
      %p151 = scmp.eq.s32.totalorder %s26, 3
      %p152 = por %p150, %p151
      %p153 = scmp.ne.s32.totalorder %s142, %s143
      %p154 = scmp.eq.s32.totalorder %s26, 0
      %p155 = por %p153, %p154
      %p156 = scmp.ne.s32.totalorder %s142, %s143
      %p157 = scmp.eq.s32.totalorder %s27, 3
      %p158 = por %p156, %p157
      %p160 = scmp.ne.s32.totalorder %s143, %s159
      %p161 = scmp.eq.s32.totalorder %s27, 0
      %p162 = por %p160, %p161
      %p163 = scmp.le.s32.totalorder 1, %s21
      %p164 = scmp.lt.s32.totalorder %s21, 5
      %p165 = pnand %p163, %p164
      %p166 = pneg %p165
      // Predicated region
      $region9: #{tpu_custom_call.1} parent=5 // pred_check
        _
      $region10: #{tpu_custom_call.1} parent=5 // pred_check_branch
        %168 = sbr.rel (%p165) target = $region12
      $region11: #{tpu_custom_call.1} parent=5 // pred_region
        %s169 = ssub.s32 %s21, 1
        // Predicated region
        $region13: #{tpu_custom_call.1} parent=11 // pred_check
          %p170 = pneg %p106
        $region14: #{tpu_custom_call.1} parent=11 // pred_check_branch
          %172 = sbr.rel (%p170) target = $region16
        $region15: #{tpu_custom_call.1} parent=11 // pred_region
          %s174 = ssub.s32 16, 16
          %175 = vsyncadd [#allocation5], %s174
          %s177 = sshll.u32 %s2, 4
          %s178 = int_to_ptr.vmem [resolvable:$true] %s177
          %180 = dma.vmem_to_smem %s178, 16, [#allocation8], [#allocation5]
        $region16: #{tpu_custom_call.1} parent=11 // pred_fallthru
          _
        // Predicated region
        $region17: #{tpu_custom_call.1} parent=11 // pred_check
          %p181 = pneg %p127
        $region18: #{tpu_custom_call.1} parent=11 // pred_check_branch
          %183 = sbr.rel (%p181) target = $region20
        $region19: #{tpu_custom_call.1} parent=11 // pred_region
          %s185 = ssub.s32 16, 16
          %186 = vsyncadd [#allocation10], %s185
          %s188 = sshll.u32 %s3, 4
          %s189 = int_to_ptr.vmem [resolvable:$true] %s188
          %191 = dma.vmem_to_smem %s189, 16, [#allocation9], [#allocation10]
        $region20: #{tpu_custom_call.1} parent=11 // pred_fallthru
          _
      $region12: #{tpu_custom_call.1} parent=5 // pred_fallthru
        _
      %p192 = scmp.lt.s32.totalorder %s21, 4
      // Predicated region
      $region21: #{tpu_custom_call.1} parent=5 // pred_check
        %p193 = pneg %p192
      $region22: #{tpu_custom_call.1} parent=5 // pred_check_branch
        %195 = sbr.rel (%p193) target = $region24
      $region23: #{tpu_custom_call.1} parent=5 // pred_region
        // Predicated region
        $region25: #{tpu_custom_call.1} parent=23 // pred_check
          %p196 = pneg %p53
        $region26: #{tpu_custom_call.1} parent=23 // pred_check_branch
          %198 = sbr.rel (%p196) target = $region28
        $region27: #{tpu_custom_call.1} parent=23 // pred_region
          %s199 = sand.u32 %s43, 1
          %s200 = scalar_lea.sflag [#allocation3], %s199
          %s201 = sand.u32 %s43, 1
          %s202 = smul.addr %s201, 48
          %s203 = scalar_lea.vmem [#allocation2], %s202
          %s205 = ssub.s32 768, 768
          %206 = vsyncadd %s200, %s205
          %s207 = smul.addr %s28, 6
          %s208 = smul.addr %s207, 128
          %s209 = scalar_lea.hbm %s0, %s208
          %s210 = sshll.u32 %s203, 4
          %s211 = int_to_ptr.vmem [resolvable:$true] %s210
          %216 = dma.hbm_to_vmem [thread:$0]  %s209, 768, %s211, %s200, 128, 128, 8
        $region28: #{tpu_custom_call.1} parent=23 // pred_fallthru
          _
        // Predicated region
        $region29: #{tpu_custom_call.1} parent=23 // pred_check
          %p217 = pneg %p79
        $region30: #{tpu_custom_call.1} parent=23 // pred_check_branch
          %219 = sbr.rel (%p217) target = $region32
        $region31: #{tpu_custom_call.1} parent=23 // pred_region
          %s220 = sand.u32 %s69, 1
          %s221 = scalar_lea.sflag [#allocation7], %s220
          %s222 = sand.u32 %s69, 1
          %s223 = smul.addr %s222, 16
          %s224 = scalar_lea.vmem [#allocation6], %s223
          %s226 = ssub.s32 256, 256
          %227 = vsyncadd %s221, %s226
          %s228 = smul.addr %s28, 2
          %s229 = smul.addr %s228, 128
          %s230 = scalar_lea.hbm %s1, %s229
          %s231 = sshll.u32 %s224, 4
          %s232 = int_to_ptr.vmem [resolvable:$true] %s231
          %237 = dma.hbm_to_vmem [thread:$0]  %s230, 256, %s232, %s221, 128, 128, 8
        $region32: #{tpu_custom_call.1} parent=23 // pred_fallthru
          _
      $region24: #{tpu_custom_call.1} parent=5 // pred_fallthru
        _
      %p238 = scmp.le.s32.totalorder 1, %s21
      %p239 = scmp.lt.s32.totalorder %s21, 5
      %p240 = pnand %p238, %p239
      %p241 = pneg %p240
      // Predicated region
      $region33: #{tpu_custom_call.1} parent=5 // pred_check
        _
      $region34: #{tpu_custom_call.1} parent=5 // pred_check_branch
        %243 = sbr.rel (%p240) target = $region36
      $region35: #{tpu_custom_call.1} parent=5 // pred_region
        %s244 = ssub.s32 %s21, 1
        %s245 = sand.u32 %s46, 1
        %s246 = scalar_lea.sflag [#allocation3], %s245
        %s247 = sand.u32 %s46, 1
        %s248 = smul.addr %s247, 48
        %s249 = scalar_lea.vmem [#allocation2], %s248
        // Predicated region
        $region37: #{tpu_custom_call.1} parent=35 // pred_check
          %p250 = pneg %p59
        $region38: #{tpu_custom_call.1} parent=35 // pred_check_branch
          %252 = sbr.rel (%p250) target = $region40
        $region39: #{tpu_custom_call.1} parent=35 // pred_region
          %253 = dma.done %s246, 768
        $region40: #{tpu_custom_call.1} parent=35 // pred_fallthru
          _
        %s254 = sand.u32 %s72, 1
        %s255 = scalar_lea.sflag [#allocation7], %s254
        %s256 = sand.u32 %s72, 1
        %s257 = smul.addr %s256, 16
        %s258 = scalar_lea.vmem [#allocation6], %s257
        // Predicated region
        $region41: #{tpu_custom_call.1} parent=35 // pred_check
          %p259 = pneg %p85
        $region42: #{tpu_custom_call.1} parent=35 // pred_check_branch
          %261 = sbr.rel (%p259) target = $region44
        $region43: #{tpu_custom_call.1} parent=35 // pred_region
          %262 = dma.done %s255, 256
        $region44: #{tpu_custom_call.1} parent=35 // pred_fallthru
          _
        // Predicated region
        $region45: #{tpu_custom_call.1} parent=35 // pred_check
          %p263 = pneg %p106
        $region46: #{tpu_custom_call.1} parent=35 // pred_check_branch
          %265 = sbr.rel (%p263) target = $region48
        $region47: #{tpu_custom_call.1} parent=35 // pred_region
          %266 = dma.done [#allocation5], 16
        $region48: #{tpu_custom_call.1} parent=35 // pred_fallthru
          _
        // Predicated region
        $region49: #{tpu_custom_call.1} parent=35 // pred_check
          %p267 = pneg %p127
        $region50: #{tpu_custom_call.1} parent=35 // pred_check_branch
          %269 = sbr.rel (%p267) target = $region52
        $region51: #{tpu_custom_call.1} parent=35 // pred_region
          %270 = dma.done [#allocation10], 16
        $region52: #{tpu_custom_call.1} parent=35 // pred_fallthru
          _
        %271 = sfence
        %s272 = sand.u32 %s46, 1
        %s273 = scalar_lea.sflag [#allocation3], %s272
        %s274 = sand.u32 %s46, 1
        %s275 = smul.addr %s274, 48
        %s276 = scalar_lea.vmem [#allocation2], %s275
        %p277 = pneg %p59
        %p278 = pneg %p56
        %s279 = sand.u32 %s72, 1
        %s280 = scalar_lea.sflag [#allocation7], %s279
        %s281 = sand.u32 %s72, 1
        %s282 = smul.addr %s281, 16
        %s283 = scalar_lea.vmem [#allocation6], %s282
        %p284 = pneg %p85
        %p285 = pneg %p82
        %p286 = pneg %p106
        %p287 = pneg %p103
        %p288 = pneg %p127
        %p289 = pneg %p124
        %p290 = pneg %p155
        %p291 = pneg %p152
        %s292 = sand.u32 %s142, 1
        %s293 = scalar_lea.sflag [#allocation4], %s292
        %s294 = sand.u32 %s142, 1
        %s295 = smul.addr %s294, 24
        %s296 = scalar_lea.vmem [#allocation11], %s295
        %s297 = smul.u32 %s31, 8
        %s298 = sld [smem:[#allocation8]]
        %s299 = sld [smem:[#allocation8 + $0x1]]
        %s300 = sld [smem:[#allocation8 + $0x2]]
        %s301 = sld [smem:[#allocation8 + $0x3]]
        %s302 = sld [smem:[#allocation8 + $0x4]]
        %s303 = sld [smem:[#allocation8 + $0x5]]
        %s304 = sld [smem:[#allocation8 + $0x6]]
        %s305 = sld [smem:[#allocation8 + $0x7]]
        %s306 = sld [smem:[#allocation8 + $0x8]]
        %s307 = sld [smem:[#allocation8 + $0x9]]
        %s308 = sld [smem:[#allocation8 + $0xa]]
        %s309 = sld [smem:[#allocation8 + $0xb]]
        %s310 = sld [smem:[#allocation8 + $0xc]]
        %s311 = sld [smem:[#allocation8 + $0xd]]
        %s312 = sld [smem:[#allocation8 + $0xe]]
        %s313 = sld [smem:[#allocation8 + $0xf]]
        %s314 = sld [smem:[#allocation8 + $0x10]]
        %s315 = sld [smem:[#allocation8 + $0x11]]
        %s316 = sld [smem:[#allocation8 + $0x12]]
        %s317 = sld [smem:[#allocation8 + $0x13]]
        %s318 = sld [smem:[#allocation8 + $0x14]]
        %s319 = sld [smem:[#allocation8 + $0x15]]
        %s320 = sld [smem:[#allocation8 + $0x16]]
        %s321 = sld [smem:[#allocation8 + $0x17]]
        %s322 = sld [smem:[#allocation8 + $0x18]]
        %s323 = sld [smem:[#allocation8 + $0x19]]
        %s324 = sld [smem:[#allocation8 + $0x1a]]
        %s325 = sld [smem:[#allocation8 + $0x1b]]
        %s326 = sld [smem:[#allocation8 + $0x1c]]
        %s327 = sld [smem:[#allocation8 + $0x1d]]
        %s328 = sld [smem:[#allocation8 + $0x1e]]
        %s329 = sld [smem:[#allocation8 + $0x1f]]
        %s330 = sld [smem:[#allocation8 + $0x20]]
        %s331 = sld [smem:[#allocation8 + $0x21]]
        %s332 = sld [smem:[#allocation8 + $0x22]]
        %s333 = sld [smem:[#allocation8 + $0x23]]
        %s334 = sld [smem:[#allocation8 + $0x24]]
        %s335 = sld [smem:[#allocation8 + $0x25]]
        %s336 = sld [smem:[#allocation8 + $0x26]]
        %s337 = sld [smem:[#allocation8 + $0x27]]
        %s338 = sld [smem:[#allocation8 + $0x28]]
        %s339 = sld [smem:[#allocation8 + $0x29]]
        %s340 = sld [smem:[#allocation8 + $0x2a]]
        %s341 = sld [smem:[#allocation8 + $0x2b]]
        %s342 = sld [smem:[#allocation8 + $0x2c]]
        %s343 = sld [smem:[#allocation8 + $0x2d]]
        %s344 = sld [smem:[#allocation8 + $0x2e]]
        %s345 = sld [smem:[#allocation8 + $0x2f]]
        %s346 = sld [smem:[#allocation8 + $0x30]]
        %s347 = sld [smem:[#allocation8 + $0x31]]
        %s348 = sld [smem:[#allocation8 + $0x32]]
        %s349 = sld [smem:[#allocation8 + $0x33]]
        %s350 = sld [smem:[#allocation8 + $0x34]]
        %s351 = sld [smem:[#allocation8 + $0x35]]
        %s352 = sld [smem:[#allocation8 + $0x36]]
        %s353 = sld [smem:[#allocation8 + $0x37]]
        %s354 = sld [smem:[#allocation8 + $0x38]]
        %s355 = sld [smem:[#allocation8 + $0x39]]
        %s356 = sld [smem:[#allocation8 + $0x3a]]
        %s357 = sld [smem:[#allocation8 + $0x3b]]
        %s358 = sld [smem:[#allocation8 + $0x3c]]
        %s359 = sld [smem:[#allocation8 + $0x3d]]
        %s360 = sld [smem:[#allocation8 + $0x3e]]
        %s361 = sld [smem:[#allocation8 + $0x3f]]
        %s362 = sld [smem:[#allocation8 + $0x40]]
        %s363 = sld [smem:[#allocation8 + $0x41]]
        %s364 = sld [smem:[#allocation8 + $0x42]]
        %s365 = sld [smem:[#allocation8 + $0x43]]
        %s366 = sld [smem:[#allocation8 + $0x44]]
        %s367 = sld [smem:[#allocation8 + $0x45]]
        %s368 = sld [smem:[#allocation8 + $0x46]]
        %s369 = sld [smem:[#allocation8 + $0x47]]
        %s370 = sld [smem:[#allocation8 + $0x48]]
        %s371 = sld [smem:[#allocation8 + $0x49]]
        %s372 = sld [smem:[#allocation8 + $0x4a]]
        %s373 = sld [smem:[#allocation8 + $0x4b]]
        %s374 = sld [smem:[#allocation8 + $0x4c]]
        %s375 = sld [smem:[#allocation8 + $0x4d]]
        %s376 = sld [smem:[#allocation8 + $0x4e]]
        %s377 = sld [smem:[#allocation8 + $0x4f]]
        %s378 = sld [smem:[#allocation8 + $0x50]]
        %s379 = sld [smem:[#allocation8 + $0x51]]
        %s380 = sld [smem:[#allocation8 + $0x52]]
        %s381 = sld [smem:[#allocation8 + $0x53]]
        %s382 = sld [smem:[#allocation8 + $0x54]]
        %s383 = sld [smem:[#allocation8 + $0x55]]
        %s384 = sld [smem:[#allocation8 + $0x56]]
        %s385 = sld [smem:[#allocation8 + $0x57]]
        %s386 = sld [smem:[#allocation8 + $0x58]]
        %s387 = sld [smem:[#allocation8 + $0x59]]
        %s388 = sld [smem:[#allocation8 + $0x5a]]
        %s389 = sld [smem:[#allocation8 + $0x5b]]
        %s390 = sld [smem:[#allocation8 + $0x5c]]
        %s391 = sld [smem:[#allocation8 + $0x5d]]
        %s392 = sld [smem:[#allocation8 + $0x5e]]
        %s393 = sld [smem:[#allocation8 + $0x5f]]
        %s394 = sld [smem:[#allocation8 + $0x60]]
        %s395 = sld [smem:[#allocation8 + $0x61]]
        %s396 = sld [smem:[#allocation8 + $0x62]]
        %s397 = sld [smem:[#allocation8 + $0x63]]
        %s398 = sld [smem:[#allocation8 + $0x64]]
        %s399 = sld [smem:[#allocation8 + $0x65]]
        %s400 = sld [smem:[#allocation8 + $0x66]]
        %s401 = sld [smem:[#allocation8 + $0x67]]
        %s402 = sld [smem:[#allocation8 + $0x68]]
        %s403 = sld [smem:[#allocation8 + $0x69]]
        %s404 = sld [smem:[#allocation8 + $0x6a]]
        %s405 = sld [smem:[#allocation8 + $0x6b]]
        %s406 = sld [smem:[#allocation9]]
        %s407 = sld [smem:[#allocation9 + $0x1]]
        %s408 = sld [smem:[#allocation9 + $0x2]]
        %s409 = scalar_lea.vmem %s258, %s297 [#allocation6]
        %v410 = vld [vmem:[%s409] sm:$0xff]
        %v411 = vsub.f32 1.0, %v410
        %s412 = scalar_lea.vmem %s249, %s297 [#allocation2]
        %v413 = vld [vmem:[%s412] sm:$0xff]
        %s414 = sadd.s32 %s297, 16
        %s415 = scalar_lea.vmem %s249, %s414 [#allocation2]
        %v416 = vld [vmem:[%s415] sm:$0xff]
        %s417 = sadd.s32 %s297, 32
        %s418 = scalar_lea.vmem %s249, %s417 [#allocation2]
        %v419 = vld [vmem:[%s418] sm:$0xff]
        %v420 = vmul.f32 %v413, %v411
        %v421 = vmul.f32 %v416, %v411
        %v422 = vmul.f32 %v419, %v411
        %p423 = scmp.gt.s32.totalorder %s31, 0
        %s424 = scalar_select %p423, 1.0, 0.0
        %p425 = scmp.lt.s32.totalorder %s31, 1
        %s426 = scalar_select %p425, 1.0, 0.0
        %s427 = ssub.s32 %s297, 1
        %p428 = scmp.gt.s32.totalorder %s427, 0
        %s429 = scalar_select %p428, %s427, 0
        %s430 = sadd.s32 %s297, 8
        %p431 = scmp.lt.s32.totalorder %s430, 15
        %s432 = scalar_select %p431, %s430, 15
        %s433 = scalar_lea.vmem %s258, %s429 [#allocation6]
        %v434 = vld [vmem:[%s433] sm:$0x1]
        %s435 = scalar_lea.vmem %s258, %s432 [#allocation6]
        %v436 = vld [vmem:[%s435] sm:$0x1]
        %s437 = scalar_lea.vmem %s249, %s429 [#allocation2]
        %v438 = vld [vmem:[%s437] sm:$0x1]
        %v439 = vsub.f32 1.0, %v434
        %v440 = vmul.f32 %v438, %v439
        %s441 = sadd.s32 %s429, 16
        %s442 = scalar_lea.vmem %s249, %s441 [#allocation2]
        %v443 = vld [vmem:[%s442] sm:$0x1]
        %v444 = vmul.f32 %v443, %v439
        %s445 = sadd.s32 %s429, 32
        %s446 = scalar_lea.vmem %s249, %s445 [#allocation2]
        %v447 = vld [vmem:[%s446] sm:$0x1]
        %v448 = vmul.f32 %v447, %v439
        %s449 = scalar_lea.vmem %s249, %s432 [#allocation2]
        %v450 = vld [vmem:[%s449] sm:$0x1]
        %v451 = vsub.f32 1.0, %v436
        %v452 = vmul.f32 %v450, %v451
        %s453 = sadd.s32 %s432, 16
        %s454 = scalar_lea.vmem %s249, %s453 [#allocation2]
        %v455 = vld [vmem:[%s454] sm:$0x1]
        %v456 = vmul.f32 %v455, %v451
        %s457 = sadd.s32 %s432, 32
        %s458 = scalar_lea.vmem %s249, %s457 [#allocation2]
        %v459 = vld [vmem:[%s458] sm:$0x1]
        %v460 = vmul.f32 %v459, %v451
        %v461 = vlaneseq
        %v462 = vshrl.u32 %v461, 7
        %v463 = vlaneseq
        %v464 = vand.u32 %v463, 127
        %vm465 = vcmp.eq.s32.totalorder %v462, 0
        %v466 = vstv %s424
        %v467 = vmul.f32 %v440, %v466
        %v468 = vrot.slane %v420, 7
        %v469 = vlaneseq
        %v470 = vshrl.u32 %v469, 7
        %v471 = vsub.s32 0, %v470
        %v472 = vrot.slane %v467, %v471
        %v473 = vsel %vm465, %v472, %v468
        %vm474 = vcmp.eq.s32.totalorder %v462, 7
        %v475 = vstv %s426
        %v476 = vmul.f32 %v452, %v475
        %v477 = vrot.slane %v420, 1
        %v478 = vlaneseq
        %v479 = vshrl.u32 %v478, 7
        %v480 = vsub.s32 0, %v479
        %v481 = vrot.slane %v476, %v480
        %v482 = vsel %vm474, %v481, %v477
        %vm483 = vcmp.eq.s32.totalorder %v464, 0
        %484 = vrot.lane.b32.xlu0 %v473, 1
        %v485 = vpop.permute.xlu0 %484
        %v486 = vsel %vm483, 0.0, %v485
        %vm487 = vcmp.eq.s32.totalorder %v464, 127
        %488 = vrot.lane.b32.xlu0 %v473, 127
        %v489 = vpop.permute.xlu0 %488
        %v490 = vsel %vm487, 0.0, %v489
        %v491 = vstv %s298
        %v492 = vmul.f32 %v486, %v491
        %v493 = vadd.f32 %v492, 0.0
        %v494 = vstv %s299
        %v495 = vmul.f32 %v486, %v494
        %v496 = vadd.f32 %v495, 0.0
        %v497 = vstv %s300
        %v498 = vmul.f32 %v486, %v497
        %v499 = vadd.f32 %v498, 0.0
        %v500 = vstv %s310
        %v501 = vmul.f32 %v473, %v500
        %v502 = vadd.f32 %v493, %v501
        %v503 = vstv %s311
        %v504 = vmul.f32 %v473, %v503
        %v505 = vadd.f32 %v496, %v504
        %v506 = vstv %s312
        %v507 = vmul.f32 %v473, %v506
        %v508 = vadd.f32 %v499, %v507
        %v509 = vstv %s322
        %v510 = vmul.f32 %v490, %v509
        %v511 = vadd.f32 %v502, %v510
        %v512 = vstv %s323
        %v513 = vmul.f32 %v490, %v512
        %v514 = vadd.f32 %v505, %v513
        %v515 = vstv %s324
        %v516 = vmul.f32 %v490, %v515
        %v517 = vadd.f32 %v508, %v516
        %518 = vrot.lane.b32.xlu0 %v420, 1
        %v519 = vpop.permute.xlu0 %518
        %v520 = vsel %vm483, 0.0, %v519
        %521 = vrot.lane.b32.xlu0 %v420, 127
        %v522 = vpop.permute.xlu0 %521
        %v523 = vsel %vm487, 0.0, %v522
        %v524 = vstv %s334
        %v525 = vmul.f32 %v520, %v524
        %v526 = vadd.f32 %v511, %v525
        %v527 = vstv %s335
        %v528 = vmul.f32 %v520, %v527
        %v529 = vadd.f32 %v514, %v528
        %v530 = vstv %s336
        %v531 = vmul.f32 %v520, %v530
        %v532 = vadd.f32 %v517, %v531
        %v533 = vstv %s346
        %v534 = vmul.f32 %v420, %v533
        %v535 = vadd.f32 %v526, %v534
        %v536 = vstv %s347
        %v537 = vmul.f32 %v420, %v536
        %v538 = vadd.f32 %v529, %v537
        %v539 = vstv %s348
        %v540 = vmul.f32 %v420, %v539
        %v541 = vadd.f32 %v532, %v540
        %v542 = vstv %s358
        %v543 = vmul.f32 %v523, %v542
        %v544 = vadd.f32 %v535, %v543
        %v545 = vstv %s359
        %v546 = vmul.f32 %v523, %v545
        %v547 = vadd.f32 %v538, %v546
        %v548 = vstv %s360
        %v549 = vmul.f32 %v523, %v548
        %v550 = vadd.f32 %v541, %v549
        %551 = vrot.lane.b32.xlu0 %v482, 1
        %v552 = vpop.permute.xlu0 %551
        %v553 = vsel %vm483, 0.0, %v552
        %554 = vrot.lane.b32.xlu0 %v482, 127
        %v555 = vpop.permute.xlu0 %554
        %v556 = vsel %vm487, 0.0, %v555
        %v557 = vstv %s370
        %v558 = vmul.f32 %v553, %v557
        %v559 = vadd.f32 %v544, %v558
        %v560 = vstv %s371
        %v561 = vmul.f32 %v553, %v560
        %v562 = vadd.f32 %v547, %v561
        %v563 = vstv %s372
        %v564 = vmul.f32 %v553, %v563
        %v565 = vadd.f32 %v550, %v564
        %v566 = vstv %s382
        %v567 = vmul.f32 %v482, %v566
        %v568 = vadd.f32 %v559, %v567
        %v569 = vstv %s383
        %v570 = vmul.f32 %v482, %v569
        %v571 = vadd.f32 %v562, %v570
        %v572 = vstv %s384
        %v573 = vmul.f32 %v482, %v572
        %v574 = vadd.f32 %v565, %v573
        %v575 = vstv %s394
        %v576 = vmul.f32 %v556, %v575
        %v577 = vadd.f32 %v568, %v576
        %v578 = vstv %s395
        %v579 = vmul.f32 %v556, %v578
        %v580 = vadd.f32 %v571, %v579
        %v581 = vstv %s396
        %v582 = vmul.f32 %v556, %v581
        %v583 = vadd.f32 %v574, %v582
        %v584 = vmul.f32 %v444, %v466
        %v585 = vrot.slane %v421, 7
        %v586 = vlaneseq
        %v587 = vshrl.u32 %v586, 7
        %v588 = vsub.s32 0, %v587
        %v589 = vrot.slane %v584, %v588
        %v590 = vsel %vm465, %v589, %v585
        %v591 = vmul.f32 %v456, %v475
        %v592 = vrot.slane %v421, 1
        %v593 = vlaneseq
        %v594 = vshrl.u32 %v593, 7
        %v595 = vsub.s32 0, %v594
        %v596 = vrot.slane %v591, %v595
        %v597 = vsel %vm474, %v596, %v592
        %598 = vrot.lane.b32.xlu0 %v590, 1
        %v599 = vpop.permute.xlu0 %598
        %v600 = vsel %vm483, 0.0, %v599
        %601 = vrot.lane.b32.xlu0 %v590, 127
        %v602 = vpop.permute.xlu0 %601
        %v603 = vsel %vm487, 0.0, %v602
        %v604 = vstv %s301
        %v605 = vmul.f32 %v600, %v604
        %v606 = vadd.f32 %v577, %v605
        %v607 = vstv %s302
        %v608 = vmul.f32 %v600, %v607
        %v609 = vadd.f32 %v580, %v608
        %v610 = vstv %s303
        %v611 = vmul.f32 %v600, %v610
        %v612 = vadd.f32 %v583, %v611
        %v613 = vstv %s313
        %v614 = vmul.f32 %v590, %v613
        %v615 = vadd.f32 %v606, %v614
        %v616 = vstv %s314
        %v617 = vmul.f32 %v590, %v616
        %v618 = vadd.f32 %v609, %v617
        %v619 = vstv %s315
        %v620 = vmul.f32 %v590, %v619
        %v621 = vadd.f32 %v612, %v620
        %v622 = vstv %s325
        %v623 = vmul.f32 %v603, %v622
        %v624 = vadd.f32 %v615, %v623
        %v625 = vstv %s326
        %v626 = vmul.f32 %v603, %v625
        %v627 = vadd.f32 %v618, %v626
        %v628 = vstv %s327
        %v629 = vmul.f32 %v603, %v628
        %v630 = vadd.f32 %v621, %v629
        %631 = vrot.lane.b32.xlu0 %v421, 1
        %v632 = vpop.permute.xlu0 %631
        %v633 = vsel %vm483, 0.0, %v632
        %634 = vrot.lane.b32.xlu0 %v421, 127
        %v635 = vpop.permute.xlu0 %634
        %v636 = vsel %vm487, 0.0, %v635
        %v637 = vstv %s337
        %v638 = vmul.f32 %v633, %v637
        %v639 = vadd.f32 %v624, %v638
        %v640 = vstv %s338
        %v641 = vmul.f32 %v633, %v640
        %v642 = vadd.f32 %v627, %v641
        %v643 = vstv %s339
        %v644 = vmul.f32 %v633, %v643
        %v645 = vadd.f32 %v630, %v644
        %v646 = vstv %s349
        %v647 = vmul.f32 %v421, %v646
        %v648 = vadd.f32 %v639, %v647
        %v649 = vstv %s350
        %v650 = vmul.f32 %v421, %v649
        %v651 = vadd.f32 %v642, %v650
        %v652 = vstv %s351
        %v653 = vmul.f32 %v421, %v652
        %v654 = vadd.f32 %v645, %v653
        %v655 = vstv %s361
        %v656 = vmul.f32 %v636, %v655
        %v657 = vadd.f32 %v648, %v656
        %v658 = vstv %s362
        %v659 = vmul.f32 %v636, %v658
        %v660 = vadd.f32 %v651, %v659
        %v661 = vstv %s363
        %v662 = vmul.f32 %v636, %v661
        %v663 = vadd.f32 %v654, %v662
        %664 = vrot.lane.b32.xlu0 %v597, 1
        %v665 = vpop.permute.xlu0 %664
        %v666 = vsel %vm483, 0.0, %v665
        %667 = vrot.lane.b32.xlu0 %v597, 127
        %v668 = vpop.permute.xlu0 %667
        %v669 = vsel %vm487, 0.0, %v668
        %v670 = vstv %s373
        %v671 = vmul.f32 %v666, %v670
        %v672 = vadd.f32 %v657, %v671
        %v673 = vstv %s374
        %v674 = vmul.f32 %v666, %v673
        %v675 = vadd.f32 %v660, %v674
        %v676 = vstv %s375
        %v677 = vmul.f32 %v666, %v676
        %v678 = vadd.f32 %v663, %v677
        %v679 = vstv %s385
        %v680 = vmul.f32 %v597, %v679
        %v681 = vadd.f32 %v672, %v680
        %v682 = vstv %s386
        %v683 = vmul.f32 %v597, %v682
        %v684 = vadd.f32 %v675, %v683
        %v685 = vstv %s387
        %v686 = vmul.f32 %v597, %v685
        %v687 = vadd.f32 %v678, %v686
        %v688 = vstv %s397
        %v689 = vmul.f32 %v669, %v688
        %v690 = vadd.f32 %v681, %v689
        %v691 = vstv %s398
        %v692 = vmul.f32 %v669, %v691
        %v693 = vadd.f32 %v684, %v692
        %v694 = vstv %s399
        %v695 = vmul.f32 %v669, %v694
        %v696 = vadd.f32 %v687, %v695
        %v697 = vmul.f32 %v448, %v466
        %v698 = vrot.slane %v422, 7
        %v699 = vlaneseq
        %v700 = vshrl.u32 %v699, 7
        %v701 = vsub.s32 0, %v700
        %v702 = vrot.slane %v697, %v701
        %v703 = vsel %vm465, %v702, %v698
        %v704 = vmul.f32 %v460, %v475
        %v705 = vrot.slane %v422, 1
        %v706 = vlaneseq
        %v707 = vshrl.u32 %v706, 7
        %v708 = vsub.s32 0, %v707
        %v709 = vrot.slane %v704, %v708
        %v710 = vsel %vm474, %v709, %v705
        %711 = vrot.lane.b32.xlu0 %v703, 1
        %v712 = vpop.permute.xlu0 %711
        %v713 = vsel %vm483, 0.0, %v712
        %714 = vrot.lane.b32.xlu0 %v703, 127
        %v715 = vpop.permute.xlu0 %714
        %v716 = vsel %vm487, 0.0, %v715
        %v717 = vstv %s304
        %v718 = vmul.f32 %v713, %v717
        %v719 = vadd.f32 %v690, %v718
        %v720 = vstv %s305
        %v721 = vmul.f32 %v713, %v720
        %v722 = vadd.f32 %v693, %v721
        %v723 = vstv %s306
        %v724 = vmul.f32 %v713, %v723
        %v725 = vadd.f32 %v696, %v724
        %v726 = vstv %s316
        %v727 = vmul.f32 %v703, %v726
        %v728 = vadd.f32 %v719, %v727
        %v729 = vstv %s317
        %v730 = vmul.f32 %v703, %v729
        %v731 = vadd.f32 %v722, %v730
        %v732 = vstv %s318
        %v733 = vmul.f32 %v703, %v732
        %v734 = vadd.f32 %v725, %v733
        %v735 = vstv %s328
        %v736 = vmul.f32 %v716, %v735
        %v737 = vadd.f32 %v728, %v736
        %v738 = vstv %s329
        %v739 = vmul.f32 %v716, %v738
        %v740 = vadd.f32 %v731, %v739
        %v741 = vstv %s330
        %v742 = vmul.f32 %v716, %v741
        %v743 = vadd.f32 %v734, %v742
        %744 = vrot.lane.b32.xlu0 %v422, 1
        %v745 = vpop.permute.xlu0 %744
        %v746 = vsel %vm483, 0.0, %v745
        %747 = vrot.lane.b32.xlu0 %v422, 127
        %v748 = vpop.permute.xlu0 %747
        %v749 = vsel %vm487, 0.0, %v748
        %v750 = vstv %s340
        %v751 = vmul.f32 %v746, %v750
        %v752 = vadd.f32 %v737, %v751
        %v753 = vstv %s341
        %v754 = vmul.f32 %v746, %v753
        %v755 = vadd.f32 %v740, %v754
        %v756 = vstv %s342
        %v757 = vmul.f32 %v746, %v756
        %v758 = vadd.f32 %v743, %v757
        %v759 = vstv %s352
        %v760 = vmul.f32 %v422, %v759
        %v761 = vadd.f32 %v752, %v760
        %v762 = vstv %s353
        %v763 = vmul.f32 %v422, %v762
        %v764 = vadd.f32 %v755, %v763
        %v765 = vstv %s354
        %v766 = vmul.f32 %v422, %v765
        %v767 = vadd.f32 %v758, %v766
        %v768 = vstv %s364
        %v769 = vmul.f32 %v749, %v768
        %v770 = vadd.f32 %v761, %v769
        %v771 = vstv %s365
        %v772 = vmul.f32 %v749, %v771
        %v773 = vadd.f32 %v764, %v772
        %v774 = vstv %s366
        %v775 = vmul.f32 %v749, %v774
        %v776 = vadd.f32 %v767, %v775
        %777 = vrot.lane.b32.xlu0 %v710, 1
        %v778 = vpop.permute.xlu0 %777
        %v779 = vsel %vm483, 0.0, %v778
        %780 = vrot.lane.b32.xlu0 %v710, 127
        %v781 = vpop.permute.xlu0 %780
        %v782 = vsel %vm487, 0.0, %v781
        %v783 = vstv %s376
        %v784 = vmul.f32 %v779, %v783
        %v785 = vadd.f32 %v770, %v784
        %v786 = vstv %s377
        %v787 = vmul.f32 %v779, %v786
        %v788 = vadd.f32 %v773, %v787
        %v789 = vstv %s378
        %v790 = vmul.f32 %v779, %v789
        %v791 = vadd.f32 %v776, %v790
        %v792 = vstv %s388
        %v793 = vmul.f32 %v710, %v792
        %v794 = vadd.f32 %v785, %v793
        %v795 = vstv %s389
        %v796 = vmul.f32 %v710, %v795
        %v797 = vadd.f32 %v788, %v796
        %v798 = vstv %s390
        %v799 = vmul.f32 %v710, %v798
        %v800 = vadd.f32 %v791, %v799
        %v801 = vstv %s400
        %v802 = vmul.f32 %v782, %v801
        %v803 = vadd.f32 %v794, %v802
        %v804 = vstv %s401
        %v805 = vmul.f32 %v782, %v804
        %v806 = vadd.f32 %v797, %v805
        %v807 = vstv %s402
        %v808 = vmul.f32 %v782, %v807
        %v809 = vadd.f32 %v800, %v808
        %v810 = vmul.f32 %v434, %v466
        %v811 = vrot.slane %v410, 7
        %v812 = vlaneseq
        %v813 = vshrl.u32 %v812, 7
        %v814 = vsub.s32 0, %v813
        %v815 = vrot.slane %v810, %v814
        %v816 = vsel %vm465, %v815, %v811
        %v817 = vmul.f32 %v436, %v475
        %v818 = vrot.slane %v410, 1
        %v819 = vlaneseq
        %v820 = vshrl.u32 %v819, 7
        %v821 = vsub.s32 0, %v820
        %v822 = vrot.slane %v817, %v821
        %v823 = vsel %vm474, %v822, %v818
        %824 = vrot.lane.b32.xlu0 %v816, 1
        %v825 = vpop.permute.xlu0 %824
        %v826 = vsel %vm483, 0.0, %v825
        %827 = vrot.lane.b32.xlu0 %v816, 127
        %v828 = vpop.permute.xlu0 %827
        %v829 = vsel %vm487, 0.0, %v828
        %v830 = vstv %s307
        %v831 = vmul.f32 %v826, %v830
        %v832 = vadd.f32 %v803, %v831
        %v833 = vstv %s308
        %v834 = vmul.f32 %v826, %v833
        %v835 = vadd.f32 %v806, %v834
        %v836 = vstv %s309
        %v837 = vmul.f32 %v826, %v836
        %v838 = vadd.f32 %v809, %v837
        %v839 = vstv %s319
        %v840 = vmul.f32 %v816, %v839
        %v841 = vadd.f32 %v832, %v840
        %v842 = vstv %s320
        %v843 = vmul.f32 %v816, %v842
        %v844 = vadd.f32 %v835, %v843
        %v845 = vstv %s321
        %v846 = vmul.f32 %v816, %v845
        %v847 = vadd.f32 %v838, %v846
        %v848 = vstv %s331
        %v849 = vmul.f32 %v829, %v848
        %v850 = vadd.f32 %v841, %v849
        %v851 = vstv %s332
        %v852 = vmul.f32 %v829, %v851
        %v853 = vadd.f32 %v844, %v852
        %v854 = vstv %s333
        %v855 = vmul.f32 %v829, %v854
        %v856 = vadd.f32 %v847, %v855
        %857 = vrot.lane.b32.xlu0 %v410, 1
        %v858 = vpop.permute.xlu0 %857
        %v859 = vsel %vm483, 0.0, %v858
        %860 = vrot.lane.b32.xlu0 %v410, 127
        %v861 = vpop.permute.xlu0 %860
        %v862 = vsel %vm487, 0.0, %v861
        %v863 = vstv %s343
        %v864 = vmul.f32 %v859, %v863
        %v865 = vadd.f32 %v850, %v864
        %v866 = vstv %s344
        %v867 = vmul.f32 %v859, %v866
        %v868 = vadd.f32 %v853, %v867
        %v869 = vstv %s345
        %v870 = vmul.f32 %v859, %v869
        %v871 = vadd.f32 %v856, %v870
        %v872 = vstv %s355
        %v873 = vmul.f32 %v410, %v872
        %v874 = vadd.f32 %v865, %v873
        %v875 = vstv %s356
        %v876 = vmul.f32 %v410, %v875
        %v877 = vadd.f32 %v868, %v876
        %v878 = vstv %s357
        %v879 = vmul.f32 %v410, %v878
        %v880 = vadd.f32 %v871, %v879
        %v881 = vstv %s367
        %v882 = vmul.f32 %v862, %v881
        %v883 = vadd.f32 %v874, %v882
        %v884 = vstv %s368
        %v885 = vmul.f32 %v862, %v884
        %v886 = vadd.f32 %v877, %v885
        %v887 = vstv %s369
        %v888 = vmul.f32 %v862, %v887
        %v889 = vadd.f32 %v880, %v888
        %890 = vrot.lane.b32.xlu0 %v823, 1
        %v891 = vpop.permute.xlu0 %890
        %v892 = vsel %vm483, 0.0, %v891
        %893 = vrot.lane.b32.xlu0 %v823, 127
        %v894 = vpop.permute.xlu0 %893
        %v895 = vsel %vm487, 0.0, %v894
        %v896 = vstv %s379
        %v897 = vmul.f32 %v892, %v896
        %v898 = vadd.f32 %v883, %v897
        %v899 = vstv %s380
        %v900 = vmul.f32 %v892, %v899
        %v901 = vadd.f32 %v886, %v900
        %v902 = vstv %s381
        %v903 = vmul.f32 %v892, %v902
        %v904 = vadd.f32 %v889, %v903
        %v905 = vstv %s391
        %v906 = vmul.f32 %v823, %v905
        %v907 = vadd.f32 %v898, %v906
        %v908 = vstv %s392
        %v909 = vmul.f32 %v823, %v908
        %v910 = vadd.f32 %v901, %v909
        %v911 = vstv %s393
        %v912 = vmul.f32 %v823, %v911
        %v913 = vadd.f32 %v904, %v912
        %v914 = vstv %s403
        %v915 = vmul.f32 %v895, %v914
        %v916 = vadd.f32 %v907, %v915
        %v917 = vstv %s404
        %v918 = vmul.f32 %v895, %v917
        %v919 = vadd.f32 %v910, %v918
        %v920 = vstv %s405
        %v921 = vmul.f32 %v895, %v920
        %v922 = vadd.f32 %v913, %v921
        %v923 = vstv %s406
        %v924 = vadd.f32 %v916, %v923
        %v925 = vxor.u32 %v924, 2147483648
        %v926 = vmul.f32 %v925, 1.442695
        %v927 = vpow.pop %v926
        %v928 = vadd.f32 %v927, 1.0
        %v929 = vrcp.pop %v928
        %v930 = vmul.f32 1.0, %v929
        %v931 = vmul.f32 %v410, %v930
        %v932 = vadd.f32 %v931, %v420
        %v933 = vmul.f32 %v932, 255.0
        %v934 = vmax.f32 %v933, 0.0
        %v935 = vmin.f32 %v934, 255.0
        %936 = vst [vmem:[%s296] sm:$0xff] %v935
        %v937 = vstv %s407
        %v938 = vadd.f32 %v919, %v937
        %v939 = vxor.u32 %v938, 2147483648
        %v940 = vmul.f32 %v939, 1.442695
        %v941 = vpow.pop %v940
        %v942 = vadd.f32 %v941, 1.0
        %v943 = vrcp.pop %v942
        %v944 = vmul.f32 1.0, %v943
        %v945 = vmul.f32 %v410, %v944
        %v946 = vadd.f32 %v945, %v421
        %v947 = vmul.f32 %v946, 255.0
        %v948 = vmax.f32 %v947, 0.0
        %v949 = vmin.f32 %v948, 255.0
        %s950 = scalar_lea.vmem %s296, 8 [#allocation11]
        %951 = vst [vmem:[%s950] sm:$0xff] %v949
        %v952 = vstv %s408
        %v953 = vadd.f32 %v922, %v952
        %v954 = vxor.u32 %v953, 2147483648
        %v955 = vmul.f32 %v954, 1.442695
        %v956 = vpow.pop %v955
        %v957 = vadd.f32 %v956, 1.0
        %v958 = vrcp.pop %v957
        %v959 = vmul.f32 1.0, %v958
        %v960 = vmul.f32 %v410, %v959
        %v961 = vadd.f32 %v960, %v422
        %v962 = vmul.f32 %v961, 255.0
        %v963 = vmax.f32 %v962, 0.0
        %v964 = vmin.f32 %v963, 255.0
        %s965 = scalar_lea.vmem %s296, 16 [#allocation11]
        %966 = vst [vmem:[%s965] sm:$0xff] %v964
        %s967 = sand.u32 %s142, 1
        %s968 = scalar_lea.sflag [#allocation4], %s967
        %s969 = sand.u32 %s142, 1
        %s970 = smul.addr %s969, 24
        %s971 = scalar_lea.vmem [#allocation11], %s970
        // Predicated region
        $region53: #{tpu_custom_call.1} parent=35 // pred_check
          %p972 = pneg %p152
        $region54: #{tpu_custom_call.1} parent=35 // pred_check_branch
          %974 = sbr.rel (%p972) target = $region56
        $region55: #{tpu_custom_call.1} parent=35 // pred_region
          %s976 = ssub.s32 384, 384
          %977 = vsyncadd %s968, %s976
          %s978 = smul.addr %s30, 6
          %s979 = sadd.s32 %s31, %s978
          %s980 = smul.addr %s979, 128
          %s981 = scalar_lea.hbm %s4, %s980
          %s982 = sshll.u32 %s971, 4
          %s983 = int_to_ptr.vmem [resolvable:$true] %s982
          %988 = dma.vmem_to_hbm [thread:$0]  %s983, 384, %s981, %s968, 128, 256, 8
        $region56: #{tpu_custom_call.1} parent=35 // pred_fallthru
          _
      $region36: #{tpu_custom_call.1} parent=5 // pred_fallthru
        _
      %p989 = scmp.le.s32.totalorder 2, %s21
      // Predicated region
      $region57: #{tpu_custom_call.1} parent=5 // pred_check
        %p990 = pneg %p989
      $region58: #{tpu_custom_call.1} parent=5 // pred_check_branch
        %992 = sbr.rel (%p990) target = $region60
      $region59: #{tpu_custom_call.1} parent=5 // pred_region
        %s993 = ssub.s32 %s21, 2
        // Predicated region
        $region61: #{tpu_custom_call.1} parent=59 // pred_check
          %p994 = pneg %p158
        $region62: #{tpu_custom_call.1} parent=59 // pred_check_branch
          %996 = sbr.rel (%p994) target = $region64
        $region63: #{tpu_custom_call.1} parent=59 // pred_region
          %s997 = sand.u32 %s143, 1
          %s998 = scalar_lea.sflag [#allocation4], %s997
          %s999 = sand.u32 %s143, 1
          %s1000 = smul.addr %s999, 24
          %s1001 = scalar_lea.vmem [#allocation11], %s1000
          %1002 = dma.done %s998, 384
        $region64: #{tpu_custom_call.1} parent=59 // pred_fallthru
          _
      $region60: #{tpu_custom_call.1} parent=5 // pred_fallthru
        _
    $region6: #{tpu_custom_call.1} parent=1 // loop_footer
      %s25 = sadd.s32 1, %s21
    $region7: #{tpu_custom_call.1} parent=1 // loop_footer_branch
      %20 = sbr.rel target = $region3
    $region8: #{tpu_custom_call.1} parent=1 // loop_exit
      _
    %1003 = vsyncpa [#allocation3], 1
    %s1004 = scalar_lea.sflag [#allocation3], 1
    %1005 = vsyncpa %s1004, 1
    %1006 = vsyncpa [#allocation7], 1
    %s1007 = scalar_lea.sflag [#allocation7], 1
    %1008 = vsyncpa %s1007, 1
    %1009 = vsyncpa [#allocation4], 1
    %s1010 = scalar_lea.sflag [#allocation4], 1
    %1011 = vsyncpa %s1010, 1
    %1012 = vsyncpa [#allocation5], 1
    %s1013 = scalar_lea.sflag [#allocation5], 1
    %1014 = vsyncpa %s1013, 1
    %1015 = vsyncpa [#allocation10], 1

</llo_original>
